<compile_context>
chip_gen: v5e
topology: v5e:2x2
jax: 0.10.0
libtpu: 0.0.40
codegen_flags: <defaults>
</compile_context>

<pallas_src>
from functools import partial

import jax
import jax.numpy as jnp
from jax import lax
from jax.experimental import pallas as pl
from jax.experimental.pallas import tpu as pltpu


def _round_up(x, m):
    return ((x + m - 1) // m) * m


def _tpu_generation():
    """Returns (VMEM capacity bytes, assumed #TensorCores per chip)."""
    cap = 64 << 20            # conservative fallback (v7x per-TC VMEM)
    n_tc = 1
    try:
        info = pltpu.get_tpu_info()
        cap = int(info.vmem_capacity_bytes)
        # v7x exposes 64 MiB per TC and has 2 TCs; v5e/v6e have 128 MiB and 1 TC.
        n_tc = 2 if cap <= (64 << 20) else 1
    except Exception:
        pass
    return cap, n_tc


def _lstm_recurrence_kernel(gx_ref, w_hh_t_ref, h_all_ref, h_scr, c_scr,
                            *, time_block, hidden, unrolled):
    """One grid step = `time_block` LSTM time steps for one batch block.

    gx_ref:     (TT, TB, 4H)  precomputed x @ W_ih^T + (b_ih + b_hh)  (gates dtype)
    w_hh_t_ref: (H, 4H)       hidden->gates weight, pre-transposed (matmul dtype)
    h_all_ref:  (TT, TB, H)   hidden states (consumed by the fc head outside the kernel)
    h_scr/c_scr:(TB, H)       persistent f32 LSTM state carried across time blocks
    """
    tt = pl.program_id(1)

    @pl.when(tt == 0)
    def _():
        h_scr[...] = jnp.zeros_like(h_scr)
        c_scr[...] = jnp.zeros_like(c_scr)

    w = w_hh_t_ref[...]          # grid-invariant; single-buffered, loaded once per block

    def step(i, h, c):
        # Only this (TB, H) x (H, 4H) matmul sits on the serial critical path.
        gates = gx_ref[i].astype(jnp.float32) + jnp.dot(
            h.astype(w.dtype), w, preferred_element_type=jnp.float32)
        # PyTorch LSTMCell gate order: input, forget, cell (g), output.
        # `hidden` is a multiple of 128 -> lane-aligned slices (no relayout).
        i_g = jax.nn.sigmoid(gates[:, 0 * hidden:1 * hidden])
        f_g = jax.nn.sigmoid(gates[:, 1 * hidden:2 * hidden])
        g_g = jnp.tanh(gates[:, 2 * hidden:3 * hidden])
        o_g = jax.nn.sigmoid(gates[:, 3 * hidden:4 * hidden])
        c = f_g * c + i_g * g_g
        h = o_g * jnp.tanh(c)
        h_all_ref[i] = h
        return h, c

    h = h_scr[...]
    c = c_scr[...]
    if unrolled:
        # Small time blocks: full compile-time unroll (max LLO scheduler visibility).
        for i in range(time_block):
            h, c = step(i, h, c)
    else:
        # Larger time blocks: fori_loop bounds live ranges; small unroll for scheduling.
        def body(i, carry):
            return step(i, *carry)
        h, c = lax.fori_loop(0, time_block, body, (h, c), unroll=4)

    h_scr[...] = h
    c_scr[...] = c


def prepare_decoder_params(params, *, matmul_dtype=jnp.bfloat16):
    """One-time parameter prep (pad / transpose / cast) hoisted off the hot path."""
    f32 = jnp.float32
    H = params["w_hh"].shape[1]
    E = params["w_ih"].shape[1]
    H_pad = _round_up(H, 128)

    # per-gate padding preserves the PyTorch [i, f, g, o] gate order
    w_ih = params["w_ih"].reshape(4, H, E)
    w_hh = params["w_hh"].reshape(4, H, H)
    b = (params["b_ih"] + params["b_hh"]).reshape(4, H)

    w_ih_p = jnp.zeros((4, H_pad, E), f32).at[:, :H, :].set(w_ih)
    w_hh_p = jnp.zeros((4, H_pad, H_pad), f32).at[:, :H, :H].set(w_hh)
    b_p = jnp.zeros((4, H_pad), f32).at[:, :H].set(b)

    return {
        "E": E, "H": H, "H_pad": H_pad,
        "matmul_dtype": matmul_dtype,
        "gates_dtype": matmul_dtype,   # bf16 gates halve the dominant HBM/VMEM term
        "w_ih_t": w_ih_p.reshape(4 * H_pad, E).T.astype(matmul_dtype),       # (E, 4H_pad)
        "w_hh_t": w_hh_p.reshape(4 * H_pad, H_pad).T.astype(matmul_dtype),   # (H_pad, 4H_pad)
        "b": b_p.reshape(4 * H_pad),                                         # (4H_pad,) f32
        "w_fc_t": params["w_fc"].T.astype(matmul_dtype),                     # (H, H)
        "b_fc": params["b_fc"],                                              # (H,) f32
    }


def decoder_rnn_forward(embedded, prep, *, time_block=None):
    """embedded: (B, T, E) float32.  Returns (B, T, H) float32 (eval-mode dropout)."""
    B, T, E = embedded.shape
    assert E == prep["E"]
    H, H_pad = prep["H"], prep["H_pad"]
    mm_dtype = prep["matmul_dtype"]
    g_dtype = prep["gates_dtype"]
    f32 = jnp.float32

    cap, n_tc = _tpu_generation()
    usable = max(cap - (8 << 20), 16 << 20)

    # ---- batch padding / split (v7x: shard batch blocks across the 2 TCs) -----
    B_pad = _round_up(max(B, 8), 8)
    if n_tc >= 2 and B_pad >= 16:
        TB = _round_up(-(-B_pad // 2), 8)   # ceil(B_pad / 2), sublane-aligned
        B_pad = 2 * TB
        n_b = 2
    else:                                   # v5e/v6e: single TC, keep M as large as possible
        TB = B_pad
        n_b = 1

    # ---- time block: as large as the generation-aware VMEM budget allows ------
    gates_bytes = jnp.dtype(g_dtype).itemsize
    mm_bytes = jnp.dtype(mm_dtype).itemsize
    whh_bytes = H_pad * 4 * H_pad * mm_bytes          # single-buffered weight
    scratch_bytes = 2 * TB * H_pad * 4

    def working_set(tt):
        gx_blk = tt * TB * 4 * H_pad * gates_bytes    # double-buffered input block
        out_blk = tt * TB * H_pad * 4                 # double-buffered output block (f32)
        return 2 * gx_blk + 2 * out_blk + whh_bytes + scratch_bytes

    TT = time_block if time_block is not None else 32
    TT = min(TT, _round_up(T, 8))
    while working_set(TT) > usable and TT > 8:
        TT = max(8, TT // 2)
    assert working_set(TT) <= cap, "VMEM working set too large; reduce hidden size"

    T_pad = _round_up(T, TT)
    n_t = T_pad // TT
    vmem_limit = int(min(cap, max(working_set(TT) + (8 << 20), 32 << 20)))

    # ---- hoisted input projection: one big matmul over all T*B rows -----------
    # Time-major layout: the kernel's serial loop indexes the *leading* block axis.
    x_p = jnp.zeros((T_pad, B_pad, E), f32).at[:T, :B, :].set(
        jnp.transpose(embedded, (1, 0, 2)))
    gates_x = (jnp.dot(x_p.reshape(T_pad * B_pad, E).astype(mm_dtype),
                       prep["w_ih_t"],
                       preferred_element_type=f32) + prep["b"]).astype(g_dtype)
    gates_x = gates_x.reshape(T_pad, B_pad, 4 * H_pad)

    # ---- Pallas recurrence (the only sequential part) --------------------------
    h_all = pl.pallas_call(
        partial(_lstm_recurrence_kernel, time_block=TT, hidden=H_pad,
                unrolled=TT <= 8),
        out_shape=jax.ShapeDtypeStruct((T_pad, B_pad, H_pad), jnp.float32),
        grid_spec=pltpu.PrefetchScalarGridSpec(
            num_scalar_prefetch=0,
            grid=(n_b, n_t),
            in_specs=[
                pl.BlockSpec((TT, TB, 4 * H_pad), lambda bb, tt: (tt, bb, 0)),
                # grid-invariant weight: single-buffered to save VMEM
                pl.BlockSpec((H_pad, 4 * H_pad), lambda bb, tt: (0, 0),
                             pipeline_mode=pl.Buffered(1)),
            ],
            out_specs=pl.BlockSpec((TT, TB, H_pad), lambda bb, tt: (tt, bb, 0)),
            scratch_shapes=[
                pltpu.VMEM((TB, H_pad), jnp.float32),   # hidden state
                pltpu.VMEM((TB, H_pad), jnp.float32),   # cell state
            ],
        ),
        compiler_params=pltpu.CompilerParams(
            # batch blocks are independent (megacore-parallel on v7x);
            # time carries h/c state -> sequential.
            dimension_semantics=("parallel", "arbitrary"),
            vmem_limit_bytes=vmem_limit,
        ),
    )(gates_x, prep["w_hh_t"])

    # ---- hoisted output head: one big matmul over all T*B hidden states -------
    h_seq = h_all[:T, :B, :H]
    out = jnp.dot(h_seq.reshape(T * B, H).astype(mm_dtype), prep["w_fc_t"],
                  preferred_element_type=f32) + prep["b_fc"]
    # dropout: eval mode -> identity
    return jnp.transpose(out.reshape(T, B, H), (1, 0, 2))


def init_params(key, embed_size, hidden_size):
    """Deterministic init matching PyTorch LSTMCell/Linear parameter shapes."""
    k = 1.0 / jnp.sqrt(hidden_size)
    ks = jax.random.split(key, 6)
    u = lambda kk, shape: jax.random.uniform(kk, shape, jnp.float32, -k, k)
    return {
        "w_ih": u(ks[0], (4 * hidden_size, embed_size)),
        "w_hh": u(ks[1], (4 * hidden_size, hidden_size)),
        "b_ih": u(ks[2], (4 * hidden_size,)),
        "b_hh": u(ks[3], (4 * hidden_size,)),
        "w_fc": u(ks[4], (hidden_size, hidden_size)),
        "b_fc": u(ks[5], (hidden_size,)),
    }


def _reference_forward(embedded, params):
    """Pure-JAX f32 reference mirroring the PyTorch loop."""
    B, T, E = embedded.shape
    H = params["w_hh"].shape[1]
    h = jnp.zeros((B, H), jnp.float32)
    c = jnp.zeros((B, H), jnp.float32)
    outs = []
    for t in range(T):
        x = embedded[:, t, :]
        gates = x @ params["w_ih"].T + params["b_ih"] + h @ params["w_hh"].T + params["b_hh"]
        i_g = jax.nn.sigmoid(gates[:, 0 * H:1 * H])
        f_g = jax.nn.sigmoid(gates[:, 1 * H:2 * H])
        g_g = jnp.tanh(gates[:, 2 * H:3 * H])
        o_g = jax.nn.sigmoid(gates[:, 3 * H:4 * H])
        c = f_g * c + i_g * g_g
        h = o_g * jnp.tanh(c)
        outs.append(h @ params["w_fc"].T + params["b_fc"])
    return jnp.stack(outs, axis=1)


if __name__ == "__main__":
    B, T, E, H = 2, 8, 32, 32
    key = jax.random.PRNGKey(0)
    k_x, k_p, k_x2 = jax.random.split(key, 3)

    embedded = jax.random.normal(k_x, (B, T, E), jnp.float32)
    params = init_params(k_p, E, H)

    prep_bf16 = prepare_decoder_params(params, matmul_dtype=jnp.bfloat16)
    prep_f32 = prepare_decoder_params(params, matmul_dtype=jnp.float32)

    # default perf path (bf16 matmuls + bf16 gates, f32 state), unrolled inner loop
    out_bf16 = jax.block_until_ready(decoder_rnn_forward(embedded, prep_bf16))
    # f32 path for a tight numerical check of the recurrence structure
    out_f32 = jax.block_until_ready(decoder_rnn_forward(embedded, prep_f32))

    ref = _reference_forward(embedded, params)
    assert out_bf16.shape == (B, T, H)
    assert out_f32.shape == (B, T, H)
    assert jnp.allclose(out_f32, ref, atol=1e-4, rtol=1e-4), "f32 path mismatch vs reference"
    assert jnp.allclose(out_bf16, ref, atol=5e-2, rtol=5e-2), "bf16 path mismatch vs reference"

    # longer sequence: exercises the fori_loop inner path and multi-block time carry
    T2 = 20
    embedded2 = jax.random.normal(k_x2, (B, T2, E), jnp.float32)
    out2 = jax.block_until_ready(decoder_rnn_forward(embedded2, prep_f32, time_block=16))
    ref2 = _reference_forward(embedded2, params)
    assert out2.shape == (B, T2, H)
    assert jnp.allclose(out2, ref2, atol=1e-4, rtol=1e-4), "fori path mismatch vs reference"

    print("KERNEL_OK")
</pallas_src>

<mosaic_0001>
module attributes {stable_mosaic.version = 11 : i64} {
  func.func @_lstm_recurrence_kernel(%arg0: i32, %arg1: i32, %arg2: memref<8x8x512xbf16, #tpu.memory_space<vmem>>, %arg3: memref<128x512xbf16, #tpu.memory_space<vmem>>, %arg4: memref<8x8x128xf32, #tpu.memory_space<vmem>>, %arg5: memref<8x128xf32, #tpu.memory_space<vmem>>, %arg6: memref<8x128xf32, #tpu.memory_space<vmem>>) attributes {dimension_semantics = [#tpu.dimension_semantics<parallel>, #tpu.dimension_semantics<arbitrary>], iteration_bounds = array<i64: 1, 1>, scalar_prefetch = 0 : i64, scratch_operands = 2 : i64, tpu.core_type = #tpu.core_type<tc>, window_params = [{transform_indices = @transform_0, window_bounds = array<i64: 8, 8, 512>}, {pipeline_mode = #tpu.pipeline_mode<synchronous>, transform_indices = @transform_1, window_bounds = array<i64: 128, 512>}, {transform_indices = @transform_2, window_bounds = array<i64: 8, 8, 128>}]} {
    %c0_i32 = arith.constant 0 : i32
    %0 = arith.cmpi eq, %arg1, %c0_i32 : i32
    %1 = arith.extui %0 : i1 to i32
    %c0_i32_0 = arith.constant 0 : i32
    %2 = arith.cmpi ne, %1, %c0_i32_0 : i32
    scf.if %2 {
      %cst_82 = arith.constant 0.000000e+00 : f32
      %280 = vector.broadcast %cst_82 : f32 to vector<8x128xf32>
      %c0_83 = arith.constant 0 : index
      %c0_84 = arith.constant 0 : index
      %281 = vector.load %arg5[%c0_83, %c0_84] : memref<8x128xf32, #tpu.memory_space<vmem>>, vector<8x128xf32>
      tpu.vector_store %arg5[%c0_83, %c0_84], %280 {strides = array<i32>} : memref<8x128xf32, #tpu.memory_space<vmem>>, vector<8x128xf32>,
      %cst_85 = arith.constant 0.000000e+00 : f32
      %282 = vector.broadcast %cst_85 : f32 to vector<8x128xf32>
      %c0_86 = arith.constant 0 : index
      %c0_87 = arith.constant 0 : index
      %283 = vector.load %arg6[%c0_86, %c0_87] : memref<8x128xf32, #tpu.memory_space<vmem>>, vector<8x128xf32>
      tpu.vector_store %arg6[%c0_86, %c0_87], %282 {strides = array<i32>} : memref<8x128xf32, #tpu.memory_space<vmem>>, vector<8x128xf32>,
    } else {
    }
    %c0 = arith.constant 0 : index
    %c0_1 = arith.constant 0 : index
    %3 = vector.load %arg3[%c0, %c0_1] : memref<128x512xbf16, #tpu.memory_space<vmem>>, vector<128x512xbf16>
    %c0_2 = arith.constant 0 : index
    %c0_3 = arith.constant 0 : index
    %4 = vector.load %arg5[%c0_2, %c0_3] : memref<8x128xf32, #tpu.memory_space<vmem>>, vector<8x128xf32>
    %c0_4 = arith.constant 0 : index
    %c0_5 = arith.constant 0 : index
    %5 = vector.load %arg6[%c0_4, %c0_5] : memref<8x128xf32, #tpu.memory_space<vmem>>, vector<8x128xf32>
    %c0_6 = arith.constant 0 : index
    %c0_7 = arith.constant 0 : index
    %c0_8 = arith.constant 0 : index
    %6 = vector.load %arg2[%c0_6, %c0_7, %c0_8] : memref<8x8x512xbf16, #tpu.memory_space<vmem>>, vector<1x8x512xbf16>
    %7 = vector.shape_cast %6 : vector<1x8x512xbf16> to vector<8x512xbf16>
    %8 = arith.extf %7 : vector<8x512xbf16> to vector<8x512xf32>
    %9 = arith.truncf %4 : vector<8x128xf32> to vector<8x128xbf16>
    %cst = arith.constant dense<0.000000e+00> : vector<8x512xf32>
    %10 = tpu.matmul %9, %3, %cst {dimension_numbers = #tpu.dot_dimension_numbers<[1], [0], [0], [1], [0, 0, 1, 1], [], []>} : vector<8x128xbf16>, vector<128x512xbf16>, vector<8x512xf32> -> vector<8x512xf32>
    %11 = arith.addf %8, %10 : vector<8x512xf32>
    %12 = vector.extract_strided_slice %11 {offsets = [0, 0], sizes = [8, 128], strides = [1, 1]} : vector<8x512xf32> to vector<8x128xf32>
    %13 = arith.negf %12 : vector<8x128xf32>
    %14 = math.exp %13 : vector<8x128xf32>
    %cst_9 = arith.constant 1.000000e+00 : f32
    %15 = vector.broadcast %cst_9 : f32 to vector<8x128xf32>
    %16 = arith.addf %15, %14 : vector<8x128xf32>
    %17 = arith.divf %15, %16 : vector<8x128xf32>
    %18 = vector.extract_strided_slice %11 {offsets = [0, 128], sizes = [8, 128], strides = [1, 1]} : vector<8x512xf32> to vector<8x128xf32>
    %19 = arith.negf %18 : vector<8x128xf32>
    %20 = math.exp %19 : vector<8x128xf32>
    %cst_10 = arith.constant 1.000000e+00 : f32
    %21 = vector.broadcast %cst_10 : f32 to vector<8x128xf32>
    %22 = arith.addf %21, %20 : vector<8x128xf32>
    %23 = arith.divf %21, %22 : vector<8x128xf32>
    %24 = vector.extract_strided_slice %11 {offsets = [0, 256], sizes = [8, 128], strides = [1, 1]} : vector<8x512xf32> to vector<8x128xf32>
    %25 = math.tanh %24 : vector<8x128xf32>
    %26 = vector.extract_strided_slice %11 {offsets = [0, 384], sizes = [8, 128], strides = [1, 1]} : vector<8x512xf32> to vector<8x128xf32>
    %27 = arith.negf %26 : vector<8x128xf32>
    %28 = math.exp %27 : vector<8x128xf32>
    %cst_11 = arith.constant 1.000000e+00 : f32
    %29 = vector.broadcast %cst_11 : f32 to vector<8x128xf32>
    %30 = arith.addf %29, %28 : vector<8x128xf32>
    %31 = arith.divf %29, %30 : vector<8x128xf32>
    %32 = arith.mulf %23, %5 : vector<8x128xf32>
    %33 = arith.mulf %17, %25 : vector<8x128xf32>
    %34 = arith.addf %32, %33 : vector<8x128xf32>
    %35 = math.tanh %34 : vector<8x128xf32>
    %36 = arith.mulf %31, %35 : vector<8x128xf32>
    %c0_12 = arith.constant 0 : index
    %c0_13 = arith.constant 0 : index
    %c0_14 = arith.constant 0 : index
    %37 = vector.load %arg4[%c0_12, %c0_13, %c0_14] : memref<8x8x128xf32, #tpu.memory_space<vmem>>, vector<1x8x128xf32>
    %38 = vector.shape_cast %37 : vector<1x8x128xf32> to vector<8x128xf32>
    %39 = vector.shape_cast %36 : vector<8x128xf32> to vector<1x8x128xf32>
    tpu.vector_store %arg4[%c0_12, %c0_13, %c0_14], %39 {strides = array<i32>} : memref<8x8x128xf32, #tpu.memory_space<vmem>>, vector<1x8x128xf32>,
    %c1 = arith.constant 1 : index
    %c0_15 = arith.constant 0 : index
    %c0_16 = arith.constant 0 : index
    %40 = vector.load %arg2[%c1, %c0_15, %c0_16] : memref<8x8x512xbf16, #tpu.memory_space<vmem>>, vector<1x8x512xbf16>
    %41 = vector.shape_cast %40 : vector<1x8x512xbf16> to vector<8x512xbf16>
    %42 = arith.extf %41 : vector<8x512xbf16> to vector<8x512xf32>
    %43 = arith.truncf %36 : vector<8x128xf32> to vector<8x128xbf16>
    %cst_17 = arith.constant dense<0.000000e+00> : vector<8x512xf32>
    %44 = tpu.matmul %43, %3, %cst_17 {dimension_numbers = #tpu.dot_dimension_numbers<[1], [0], [0], [1], [0, 0, 1, 1], [], []>} : vector<8x128xbf16>, vector<128x512xbf16>, vector<8x512xf32> -> vector<8x512xf32>
    %45 = arith.addf %42, %44 : vector<8x512xf32>
    %46 = vector.extract_strided_slice %45 {offsets = [0, 0], sizes = [8, 128], strides = [1, 1]} : vector<8x512xf32> to vector<8x128xf32>
    %47 = arith.negf %46 : vector<8x128xf32>
    %48 = math.exp %47 : vector<8x128xf32>
    %cst_18 = arith.constant 1.000000e+00 : f32
    %49 = vector.broadcast %cst_18 : f32 to vector<8x128xf32>
    %50 = arith.addf %49, %48 : vector<8x128xf32>
    %51 = arith.divf %49, %50 : vector<8x128xf32>
    %52 = vector.extract_strided_slice %45 {offsets = [0, 128], sizes = [8, 128], strides = [1, 1]} : vector<8x512xf32> to vector<8x128xf32>
    %53 = arith.negf %52 : vector<8x128xf32>
    %54 = math.exp %53 : vector<8x128xf32>
    %cst_19 = arith.constant 1.000000e+00 : f32
    %55 = vector.broadcast %cst_19 : f32 to vector<8x128xf32>
    %56 = arith.addf %55, %54 : vector<8x128xf32>
    %57 = arith.divf %55, %56 : vector<8x128xf32>
    %58 = vector.extract_strided_slice %45 {offsets = [0, 256], sizes = [8, 128], strides = [1, 1]} : vector<8x512xf32> to vector<8x128xf32>
    %59 = math.tanh %58 : vector<8x128xf32>
    %60 = vector.extract_strided_slice %45 {offsets = [0, 384], sizes = [8, 128], strides = [1, 1]} : vector<8x512xf32> to vector<8x128xf32>
    %61 = arith.negf %60 : vector<8x128xf32>
    %62 = math.exp %61 : vector<8x128xf32>
    %cst_20 = arith.constant 1.000000e+00 : f32
    %63 = vector.broadcast %cst_20 : f32 to vector<8x128xf32>
    %64 = arith.addf %63, %62 : vector<8x128xf32>
    %65 = arith.divf %63, %64 : vector<8x128xf32>
    %66 = arith.mulf %57, %34 : vector<8x128xf32>
    %67 = arith.mulf %51, %59 : vector<8x128xf32>
    %68 = arith.addf %66, %67 : vector<8x128xf32>
    %69 = math.tanh %68 : vector<8x128xf32>
    %70 = arith.mulf %65, %69 : vector<8x128xf32>
    %c1_21 = arith.constant 1 : index
    %c0_22 = arith.constant 0 : index
    %c0_23 = arith.constant 0 : index
    %71 = vector.load %arg4[%c1_21, %c0_22, %c0_23] : memref<8x8x128xf32, #tpu.memory_space<vmem>>, vector<1x8x128xf32>
    %72 = vector.shape_cast %71 : vector<1x8x128xf32> to vector<8x128xf32>
    %73 = vector.shape_cast %70 : vector<8x128xf32> to vector<1x8x128xf32>
    tpu.vector_store %arg4[%c1_21, %c0_22, %c0_23], %73 {strides = array<i32>} : memref<8x8x128xf32, #tpu.memory_space<vmem>>, vector<1x8x128xf32>,
    %c2 = arith.constant 2 : index
    %c0_24 = arith.constant 0 : index
    %c0_25 = arith.constant 0 : index
    %74 = vector.load %arg2[%c2, %c0_24, %c0_25] : memref<8x8x512xbf16, #tpu.memory_space<vmem>>, vector<1x8x512xbf16>
    %75 = vector.shape_cast %74 : vector<1x8x512xbf16> to vector<8x512xbf16>
    %76 = arith.extf %75 : vector<8x512xbf16> to vector<8x512xf32>
    %77 = arith.truncf %70 : vector<8x128xf32> to vector<8x128xbf16>
    %cst_26 = arith.constant dense<0.000000e+00> : vector<8x512xf32>
    %78 = tpu.matmul %77, %3, %cst_26 {dimension_numbers = #tpu.dot_dimension_numbers<[1], [0], [0], [1], [0, 0, 1, 1], [], []>} : vector<8x128xbf16>, vector<128x512xbf16>, vector<8x512xf32> -> vector<8x512xf32>
    %79 = arith.addf %76, %78 : vector<8x512xf32>
    %80 = vector.extract_strided_slice %79 {offsets = [0, 0], sizes = [8, 128], strides = [1, 1]} : vector<8x512xf32> to vector<8x128xf32>
    %81 = arith.negf %80 : vector<8x128xf32>
    %82 = math.exp %81 : vector<8x128xf32>
    %cst_27 = arith.constant 1.000000e+00 : f32
    %83 = vector.broadcast %cst_27 : f32 to vector<8x128xf32>
    %84 = arith.addf %83, %82 : vector<8x128xf32>
    %85 = arith.divf %83, %84 : vector<8x128xf32>
    %86 = vector.extract_strided_slice %79 {offsets = [0, 128], sizes = [8, 128], strides = [1, 1]} : vector<8x512xf32> to vector<8x128xf32>
    %87 = arith.negf %86 : vector<8x128xf32>
    %88 = math.exp %87 : vector<8x128xf32>
    %cst_28 = arith.constant 1.000000e+00 : f32
    %89 = vector.broadcast %cst_28 : f32 to vector<8x128xf32>
    %90 = arith.addf %89, %88 : vector<8x128xf32>
    %91 = arith.divf %89, %90 : vector<8x128xf32>
    %92 = vector.extract_strided_slice %79 {offsets = [0, 256], sizes = [8, 128], strides = [1, 1]} : vector<8x512xf32> to vector<8x128xf32>
    %93 = math.tanh %92 : vector<8x128xf32>
    %94 = vector.extract_strided_slice %79 {offsets = [0, 384], sizes = [8, 128], strides = [1, 1]} : vector<8x512xf32> to vector<8x128xf32>
    %95 = arith.negf %94 : vector<8x128xf32>
    %96 = math.exp %95 : vector<8x128xf32>
    %cst_29 = arith.constant 1.000000e+00 : f32
    %97 = vector.broadcast %cst_29 : f32 to vector<8x128xf32>
    %98 = arith.addf %97, %96 : vector<8x128xf32>
    %99 = arith.divf %97, %98 : vector<8x128xf32>
    %100 = arith.mulf %91, %68 : vector<8x128xf32>
    %101 = arith.mulf %85, %93 : vector<8x128xf32>
    %102 = arith.addf %100, %101 : vector<8x128xf32>
    %103 = math.tanh %102 : vector<8x128xf32>
    %104 = arith.mulf %99, %103 : vector<8x128xf32>
    %c2_30 = arith.constant 2 : index
    %c0_31 = arith.constant 0 : index
    %c0_32 = arith.constant 0 : index
    %105 = vector.load %arg4[%c2_30, %c0_31, %c0_32] : memref<8x8x128xf32, #tpu.memory_space<vmem>>, vector<1x8x128xf32>
    %106 = vector.shape_cast %105 : vector<1x8x128xf32> to vector<8x128xf32>
    %107 = vector.shape_cast %104 : vector<8x128xf32> to vector<1x8x128xf32>
    tpu.vector_store %arg4[%c2_30, %c0_31, %c0_32], %107 {strides = array<i32>} : memref<8x8x128xf32, #tpu.memory_space<vmem>>, vector<1x8x128xf32>,
    %c3 = arith.constant 3 : index
    %c0_33 = arith.constant 0 : index
    %c0_34 = arith.constant 0 : index
    %108 = vector.load %arg2[%c3, %c0_33, %c0_34] : memref<8x8x512xbf16, #tpu.memory_space<vmem>>, vector<1x8x512xbf16>
    %109 = vector.shape_cast %108 : vector<1x8x512xbf16> to vector<8x512xbf16>
    %110 = arith.extf %109 : vector<8x512xbf16> to vector<8x512xf32>
    %111 = arith.truncf %104 : vector<8x128xf32> to vector<8x128xbf16>
    %cst_35 = arith.constant dense<0.000000e+00> : vector<8x512xf32>
    %112 = tpu.matmul %111, %3, %cst_35 {dimension_numbers = #tpu.dot_dimension_numbers<[1], [0], [0], [1], [0, 0, 1, 1], [], []>} : vector<8x128xbf16>, vector<128x512xbf16>, vector<8x512xf32> -> vector<8x512xf32>
    %113 = arith.addf %110, %112 : vector<8x512xf32>
    %114 = vector.extract_strided_slice %113 {offsets = [0, 0], sizes = [8, 128], strides = [1, 1]} : vector<8x512xf32> to vector<8x128xf32>
    %115 = arith.negf %114 : vector<8x128xf32>
    %116 = math.exp %115 : vector<8x128xf32>
    %cst_36 = arith.constant 1.000000e+00 : f32
    %117 = vector.broadcast %cst_36 : f32 to vector<8x128xf32>
    %118 = arith.addf %117, %116 : vector<8x128xf32>
    %119 = arith.divf %117, %118 : vector<8x128xf32>
    %120 = vector.extract_strided_slice %113 {offsets = [0, 128], sizes = [8, 128], strides = [1, 1]} : vector<8x512xf32> to vector<8x128xf32>
    %121 = arith.negf %120 : vector<8x128xf32>
    %122 = math.exp %121 : vector<8x128xf32>
    %cst_37 = arith.constant 1.000000e+00 : f32
    %123 = vector.broadcast %cst_37 : f32 to vector<8x128xf32>
    %124 = arith.addf %123, %122 : vector<8x128xf32>
    %125 = arith.divf %123, %124 : vector<8x128xf32>
    %126 = vector.extract_strided_slice %113 {offsets = [0, 256], sizes = [8, 128], strides = [1, 1]} : vector<8x512xf32> to vector<8x128xf32>
    %127 = math.tanh %126 : vector<8x128xf32>
    %128 = vector.extract_strided_slice %113 {offsets = [0, 384], sizes = [8, 128], strides = [1, 1]} : vector<8x512xf32> to vector<8x128xf32>
    %129 = arith.negf %128 : vector<8x128xf32>
    %130 = math.exp %129 : vector<8x128xf32>
    %cst_38 = arith.constant 1.000000e+00 : f32
    %131 = vector.broadcast %cst_38 : f32 to vector<8x128xf32>
    %132 = arith.addf %131, %130 : vector<8x128xf32>
    %133 = arith.divf %131, %132 : vector<8x128xf32>
    %134 = arith.mulf %125, %102 : vector<8x128xf32>
    %135 = arith.mulf %119, %127 : vector<8x128xf32>
    %136 = arith.addf %134, %135 : vector<8x128xf32>
    %137 = math.tanh %136 : vector<8x128xf32>
    %138 = arith.mulf %133, %137 : vector<8x128xf32>
    %c3_39 = arith.constant 3 : index
    %c0_40 = arith.constant 0 : index
    %c0_41 = arith.constant 0 : index
    %139 = vector.load %arg4[%c3_39, %c0_40, %c0_41] : memref<8x8x128xf32, #tpu.memory_space<vmem>>, vector<1x8x128xf32>
    %140 = vector.shape_cast %139 : vector<1x8x128xf32> to vector<8x128xf32>
    %141 = vector.shape_cast %138 : vector<8x128xf32> to vector<1x8x128xf32>
    tpu.vector_store %arg4[%c3_39, %c0_40, %c0_41], %141 {strides = array<i32>} : memref<8x8x128xf32, #tpu.memory_space<vmem>>, vector<1x8x128xf32>,
    %c4 = arith.constant 4 : index
    %c0_42 = arith.constant 0 : index
    %c0_43 = arith.constant 0 : index
    %142 = vector.load %arg2[%c4, %c0_42, %c0_43] : memref<8x8x512xbf16, #tpu.memory_space<vmem>>, vector<1x8x512xbf16>
    %143 = vector.shape_cast %142 : vector<1x8x512xbf16> to vector<8x512xbf16>
    %144 = arith.extf %143 : vector<8x512xbf16> to vector<8x512xf32>
    %145 = arith.truncf %138 : vector<8x128xf32> to vector<8x128xbf16>
    %cst_44 = arith.constant dense<0.000000e+00> : vector<8x512xf32>
    %146 = tpu.matmul %145, %3, %cst_44 {dimension_numbers = #tpu.dot_dimension_numbers<[1], [0], [0], [1], [0, 0, 1, 1], [], []>} : vector<8x128xbf16>, vector<128x512xbf16>, vector<8x512xf32> -> vector<8x512xf32>
    %147 = arith.addf %144, %146 : vector<8x512xf32>
    %148 = vector.extract_strided_slice %147 {offsets = [0, 0], sizes = [8, 128], strides = [1, 1]} : vector<8x512xf32> to vector<8x128xf32>
    %149 = arith.negf %148 : vector<8x128xf32>
    %150 = math.exp %149 : vector<8x128xf32>
    %cst_45 = arith.constant 1.000000e+00 : f32
    %151 = vector.broadcast %cst_45 : f32 to vector<8x128xf32>
    %152 = arith.addf %151, %150 : vector<8x128xf32>
    %153 = arith.divf %151, %152 : vector<8x128xf32>
    %154 = vector.extract_strided_slice %147 {offsets = [0, 128], sizes = [8, 128], strides = [1, 1]} : vector<8x512xf32> to vector<8x128xf32>
    %155 = arith.negf %154 : vector<8x128xf32>
    %156 = math.exp %155 : vector<8x128xf32>
    %cst_46 = arith.constant 1.000000e+00 : f32
    %157 = vector.broadcast %cst_46 : f32 to vector<8x128xf32>
    %158 = arith.addf %157, %156 : vector<8x128xf32>
    %159 = arith.divf %157, %158 : vector<8x128xf32>
    %160 = vector.extract_strided_slice %147 {offsets = [0, 256], sizes = [8, 128], strides = [1, 1]} : vector<8x512xf32> to vector<8x128xf32>
    %161 = math.tanh %160 : vector<8x128xf32>
    %162 = vector.extract_strided_slice %147 {offsets = [0, 384], sizes = [8, 128], strides = [1, 1]} : vector<8x512xf32> to vector<8x128xf32>
    %163 = arith.negf %162 : vector<8x128xf32>
    %164 = math.exp %163 : vector<8x128xf32>
    %cst_47 = arith.constant 1.000000e+00 : f32
    %165 = vector.broadcast %cst_47 : f32 to vector<8x128xf32>
    %166 = arith.addf %165, %164 : vector<8x128xf32>
    %167 = arith.divf %165, %166 : vector<8x128xf32>
    %168 = arith.mulf %159, %136 : vector<8x128xf32>
    %169 = arith.mulf %153, %161 : vector<8x128xf32>
    %170 = arith.addf %168, %169 : vector<8x128xf32>
    %171 = math.tanh %170 : vector<8x128xf32>
    %172 = arith.mulf %167, %171 : vector<8x128xf32>
    %c4_48 = arith.constant 4 : index
    %c0_49 = arith.constant 0 : index
    %c0_50 = arith.constant 0 : index
    %173 = vector.load %arg4[%c4_48, %c0_49, %c0_50] : memref<8x8x128xf32, #tpu.memory_space<vmem>>, vector<1x8x128xf32>
    %174 = vector.shape_cast %173 : vector<1x8x128xf32> to vector<8x128xf32>
    %175 = vector.shape_cast %172 : vector<8x128xf32> to vector<1x8x128xf32>
    tpu.vector_store %arg4[%c4_48, %c0_49, %c0_50], %175 {strides = array<i32>} : memref<8x8x128xf32, #tpu.memory_space<vmem>>, vector<1x8x128xf32>,
    %c5 = arith.constant 5 : index
    %c0_51 = arith.constant 0 : index
    %c0_52 = arith.constant 0 : index
    %176 = vector.load %arg2[%c5, %c0_51, %c0_52] : memref<8x8x512xbf16, #tpu.memory_space<vmem>>, vector<1x8x512xbf16>
    %177 = vector.shape_cast %176 : vector<1x8x512xbf16> to vector<8x512xbf16>
    %178 = arith.extf %177 : vector<8x512xbf16> to vector<8x512xf32>
    %179 = arith.truncf %172 : vector<8x128xf32> to vector<8x128xbf16>
    %cst_53 = arith.constant dense<0.000000e+00> : vector<8x512xf32>
    %180 = tpu.matmul %179, %3, %cst_53 {dimension_numbers = #tpu.dot_dimension_numbers<[1], [0], [0], [1], [0, 0, 1, 1], [], []>} : vector<8x128xbf16>, vector<128x512xbf16>, vector<8x512xf32> -> vector<8x512xf32>
    %181 = arith.addf %178, %180 : vector<8x512xf32>
    %182 = vector.extract_strided_slice %181 {offsets = [0, 0], sizes = [8, 128], strides = [1, 1]} : vector<8x512xf32> to vector<8x128xf32>
    %183 = arith.negf %182 : vector<8x128xf32>
    %184 = math.exp %183 : vector<8x128xf32>
    %cst_54 = arith.constant 1.000000e+00 : f32
    %185 = vector.broadcast %cst_54 : f32 to vector<8x128xf32>
    %186 = arith.addf %185, %184 : vector<8x128xf32>
    %187 = arith.divf %185, %186 : vector<8x128xf32>
    %188 = vector.extract_strided_slice %181 {offsets = [0, 128], sizes = [8, 128], strides = [1, 1]} : vector<8x512xf32> to vector<8x128xf32>
    %189 = arith.negf %188 : vector<8x128xf32>
    %190 = math.exp %189 : vector<8x128xf32>
    %cst_55 = arith.constant 1.000000e+00 : f32
    %191 = vector.broadcast %cst_55 : f32 to vector<8x128xf32>
    %192 = arith.addf %191, %190 : vector<8x128xf32>
    %193 = arith.divf %191, %192 : vector<8x128xf32>
    %194 = vector.extract_strided_slice %181 {offsets = [0, 256], sizes = [8, 128], strides = [1, 1]} : vector<8x512xf32> to vector<8x128xf32>
    %195 = math.tanh %194 : vector<8x128xf32>
    %196 = vector.extract_strided_slice %181 {offsets = [0, 384], sizes = [8, 128], strides = [1, 1]} : vector<8x512xf32> to vector<8x128xf32>
    %197 = arith.negf %196 : vector<8x128xf32>
    %198 = math.exp %197 : vector<8x128xf32>
    %cst_56 = arith.constant 1.000000e+00 : f32
    %199 = vector.broadcast %cst_56 : f32 to vector<8x128xf32>
    %200 = arith.addf %199, %198 : vector<8x128xf32>
    %201 = arith.divf %199, %200 : vector<8x128xf32>
    %202 = arith.mulf %193, %170 : vector<8x128xf32>
    %203 = arith.mulf %187, %195 : vector<8x128xf32>
    %204 = arith.addf %202, %203 : vector<8x128xf32>
    %205 = math.tanh %204 : vector<8x128xf32>
    %206 = arith.mulf %201, %205 : vector<8x128xf32>
    %c5_57 = arith.constant 5 : index
    %c0_58 = arith.constant 0 : index
    %c0_59 = arith.constant 0 : index
    %207 = vector.load %arg4[%c5_57, %c0_58, %c0_59] : memref<8x8x128xf32, #tpu.memory_space<vmem>>, vector<1x8x128xf32>
    %208 = vector.shape_cast %207 : vector<1x8x128xf32> to vector<8x128xf32>
    %209 = vector.shape_cast %206 : vector<8x128xf32> to vector<1x8x128xf32>
    tpu.vector_store %arg4[%c5_57, %c0_58, %c0_59], %209 {strides = array<i32>} : memref<8x8x128xf32, #tpu.memory_space<vmem>>, vector<1x8x128xf32>,
    %c6 = arith.constant 6 : index
    %c0_60 = arith.constant 0 : index
    %c0_61 = arith.constant 0 : index
    %210 = vector.load %arg2[%c6, %c0_60, %c0_61] : memref<8x8x512xbf16, #tpu.memory_space<vmem>>, vector<1x8x512xbf16>
    %211 = vector.shape_cast %210 : vector<1x8x512xbf16> to vector<8x512xbf16>
    %212 = arith.extf %211 : vector<8x512xbf16> to vector<8x512xf32>
    %213 = arith.truncf %206 : vector<8x128xf32> to vector<8x128xbf16>
    %cst_62 = arith.constant dense<0.000000e+00> : vector<8x512xf32>
    %214 = tpu.matmul %213, %3, %cst_62 {dimension_numbers = #tpu.dot_dimension_numbers<[1], [0], [0], [1], [0, 0, 1, 1], [], []>} : vector<8x128xbf16>, vector<128x512xbf16>, vector<8x512xf32> -> vector<8x512xf32>
    %215 = arith.addf %212, %214 : vector<8x512xf32>
    %216 = vector.extract_strided_slice %215 {offsets = [0, 0], sizes = [8, 128], strides = [1, 1]} : vector<8x512xf32> to vector<8x128xf32>
    %217 = arith.negf %216 : vector<8x128xf32>
    %218 = math.exp %217 : vector<8x128xf32>
    %cst_63 = arith.constant 1.000000e+00 : f32
    %219 = vector.broadcast %cst_63 : f32 to vector<8x128xf32>
    %220 = arith.addf %219, %218 : vector<8x128xf32>
    %221 = arith.divf %219, %220 : vector<8x128xf32>
    %222 = vector.extract_strided_slice %215 {offsets = [0, 128], sizes = [8, 128], strides = [1, 1]} : vector<8x512xf32> to vector<8x128xf32>
    %223 = arith.negf %222 : vector<8x128xf32>
    %224 = math.exp %223 : vector<8x128xf32>
    %cst_64 = arith.constant 1.000000e+00 : f32
    %225 = vector.broadcast %cst_64 : f32 to vector<8x128xf32>
    %226 = arith.addf %225, %224 : vector<8x128xf32>
    %227 = arith.divf %225, %226 : vector<8x128xf32>
    %228 = vector.extract_strided_slice %215 {offsets = [0, 256], sizes = [8, 128], strides = [1, 1]} : vector<8x512xf32> to vector<8x128xf32>
    %229 = math.tanh %228 : vector<8x128xf32>
    %230 = vector.extract_strided_slice %215 {offsets = [0, 384], sizes = [8, 128], strides = [1, 1]} : vector<8x512xf32> to vector<8x128xf32>
    %231 = arith.negf %230 : vector<8x128xf32>
    %232 = math.exp %231 : vector<8x128xf32>
    %cst_65 = arith.constant 1.000000e+00 : f32
    %233 = vector.broadcast %cst_65 : f32 to vector<8x128xf32>
    %234 = arith.addf %233, %232 : vector<8x128xf32>
    %235 = arith.divf %233, %234 : vector<8x128xf32>
    %236 = arith.mulf %227, %204 : vector<8x128xf32>
    %237 = arith.mulf %221, %229 : vector<8x128xf32>
    %238 = arith.addf %236, %237 : vector<8x128xf32>
    %239 = math.tanh %238 : vector<8x128xf32>
    %240 = arith.mulf %235, %239 : vector<8x128xf32>
    %c6_66 = arith.constant 6 : index
    %c0_67 = arith.constant 0 : index
    %c0_68 = arith.constant 0 : index
    %241 = vector.load %arg4[%c6_66, %c0_67, %c0_68] : memref<8x8x128xf32, #tpu.memory_space<vmem>>, vector<1x8x128xf32>
    %242 = vector.shape_cast %241 : vector<1x8x128xf32> to vector<8x128xf32>
    %243 = vector.shape_cast %240 : vector<8x128xf32> to vector<1x8x128xf32>
    tpu.vector_store %arg4[%c6_66, %c0_67, %c0_68], %243 {strides = array<i32>} : memref<8x8x128xf32, #tpu.memory_space<vmem>>, vector<1x8x128xf32>,
    %c7 = arith.constant 7 : index
    %c0_69 = arith.constant 0 : index
    %c0_70 = arith.constant 0 : index
    %244 = vector.load %arg2[%c7, %c0_69, %c0_70] : memref<8x8x512xbf16, #tpu.memory_space<vmem>>, vector<1x8x512xbf16>
    %245 = vector.shape_cast %244 : vector<1x8x512xbf16> to vector<8x512xbf16>
    %246 = arith.extf %245 : vector<8x512xbf16> to vector<8x512xf32>
    %247 = arith.truncf %240 : vector<8x128xf32> to vector<8x128xbf16>
    %cst_71 = arith.constant dense<0.000000e+00> : vector<8x512xf32>
    %248 = tpu.matmul %247, %3, %cst_71 {dimension_numbers = #tpu.dot_dimension_numbers<[1], [0], [0], [1], [0, 0, 1, 1], [], []>} : vector<8x128xbf16>, vector<128x512xbf16>, vector<8x512xf32> -> vector<8x512xf32>
    %249 = arith.addf %246, %248 : vector<8x512xf32>
    %250 = vector.extract_strided_slice %249 {offsets = [0, 0], sizes = [8, 128], strides = [1, 1]} : vector<8x512xf32> to vector<8x128xf32>
    %251 = arith.negf %250 : vector<8x128xf32>
    %252 = math.exp %251 : vector<8x128xf32>
    %cst_72 = arith.constant 1.000000e+00 : f32
    %253 = vector.broadcast %cst_72 : f32 to vector<8x128xf32>
    %254 = arith.addf %253, %252 : vector<8x128xf32>
    %255 = arith.divf %253, %254 : vector<8x128xf32>
    %256 = vector.extract_strided_slice %249 {offsets = [0, 128], sizes = [8, 128], strides = [1, 1]} : vector<8x512xf32> to vector<8x128xf32>
    %257 = arith.negf %256 : vector<8x128xf32>
    %258 = math.exp %257 : vector<8x128xf32>
    %cst_73 = arith.constant 1.000000e+00 : f32
    %259 = vector.broadcast %cst_73 : f32 to vector<8x128xf32>
    %260 = arith.addf %259, %258 : vector<8x128xf32>
    %261 = arith.divf %259, %260 : vector<8x128xf32>
    %262 = vector.extract_strided_slice %249 {offsets = [0, 256], sizes = [8, 128], strides = [1, 1]} : vector<8x512xf32> to vector<8x128xf32>
    %263 = math.tanh %262 : vector<8x128xf32>
    %264 = vector.extract_strided_slice %249 {offsets = [0, 384], sizes = [8, 128], strides = [1, 1]} : vector<8x512xf32> to vector<8x128xf32>
    %265 = arith.negf %264 : vector<8x128xf32>
    %266 = math.exp %265 : vector<8x128xf32>
    %cst_74 = arith.constant 1.000000e+00 : f32
    %267 = vector.broadcast %cst_74 : f32 to vector<8x128xf32>
    %268 = arith.addf %267, %266 : vector<8x128xf32>
    %269 = arith.divf %267, %268 : vector<8x128xf32>
    %270 = arith.mulf %261, %238 : vector<8x128xf32>
    %271 = arith.mulf %255, %263 : vector<8x128xf32>
    %272 = arith.addf %270, %271 : vector<8x128xf32>
    %273 = math.tanh %272 : vector<8x128xf32>
    %274 = arith.mulf %269, %273 : vector<8x128xf32>
    %c7_75 = arith.constant 7 : index
    %c0_76 = arith.constant 0 : index
    %c0_77 = arith.constant 0 : index
    %275 = vector.load %arg4[%c7_75, %c0_76, %c0_77] : memref<8x8x128xf32, #tpu.memory_space<vmem>>, vector<1x8x128xf32>
    %276 = vector.shape_cast %275 : vector<1x8x128xf32> to vector<8x128xf32>
    %277 = vector.shape_cast %274 : vector<8x128xf32> to vector<1x8x128xf32>
    tpu.vector_store %arg4[%c7_75, %c0_76, %c0_77], %277 {strides = array<i32>} : memref<8x8x128xf32, #tpu.memory_space<vmem>>, vector<1x8x128xf32>,
    %c0_78 = arith.constant 0 : index
    %c0_79 = arith.constant 0 : index
    %278 = vector.load %arg5[%c0_78, %c0_79] : memref<8x128xf32, #tpu.memory_space<vmem>>, vector<8x128xf32>
    tpu.vector_store %arg5[%c0_78, %c0_79], %274 {strides = array<i32>} : memref<8x128xf32, #tpu.memory_space<vmem>>, vector<8x128xf32>,
    %c0_80 = arith.constant 0 : index
    %c0_81 = arith.constant 0 : index
    %279 = vector.load %arg6[%c0_80, %c0_81] : memref<8x128xf32, #tpu.memory_space<vmem>>, vector<8x128xf32>
    tpu.vector_store %arg6[%c0_80, %c0_81], %272 {strides = array<i32>} : memref<8x128xf32, #tpu.memory_space<vmem>>, vector<8x128xf32>,
    return
  }
  func.func @transform_0(%arg0: i32, %arg1: i32) -> (i32, i32, i32) {
    %c0_i32 = arith.constant 0 : i32
    %c0_i32_0 = arith.constant 0 : i32
    return %arg1, %arg0, %c0_i32 : i32, i32, i32
  }
  func.func @transform_1(%arg0: i32, %arg1: i32) -> (i32, i32) {
    %c0_i32 = arith.constant 0 : i32
    %c0_i32_0 = arith.constant 0 : i32
    %c0_i32_1 = arith.constant 0 : i32
    return %c0_i32, %c0_i32_0 : i32, i32
  }
  func.func @transform_2(%arg0: i32, %arg1: i32) -> (i32, i32, i32) {
    %c0_i32 = arith.constant 0 : i32
    %c0_i32_0 = arith.constant 0 : i32
    return %arg1, %arg0, %c0_i32 : i32, i32, i32
  }
}

</mosaic_0001>

<llo_original>
// kernel: tpu_custom_call.1
$region0: #{tpu_custom_call.1}
  #allocation0 [shape = 'u32[]', space=smem, size = 0x4, offset = 0x4, fixed_abs, tag = 'smem constant byte address 0x4 - core index']
  #allocation1 [shape = 'u32[72,128]{1,0:T(1,128)}', space=vmem, size = 0x9000, scoped, tag = 'internal scratch']
  #allocation2 [shape = 'f32[8,128]{1,0:T(8,128)}', space=vmem, size = 0x1000, scoped, tag = 'scratch operand']
  #allocation3 [shape = 'f32[8,128]{1,0:T(8,128)}', space=vmem, size = 0x1000, scoped, tag = 'scratch operand']
  %s0 = inlined_call_operand.hbm [shape: bf16[8,8,512], index: 0, kind: input, shape index: {}]
  %s1 = inlined_call_operand.hbm [shape: bf16[128,512], index: 1, kind: input, shape index: {}]
  %s2 = inlined_call_operand.hbm [shape: f32[8,8,128], index: 2, kind: output, shape index: {}]
  %s3 = sld [smem:[#allocation0]]
  $region30: #{tpu_custom_call.1} parent=0
    _
  %s5 = ssub.s32 1, %s3
  %s6 = scalar_select 0, %s5, %s3
  $region1: #{tpu_custom_call.1} parent=0
    #allocation4 [shape = 'u8[65536]{0}', space=vmem, size = 0x10000, scoped, tag = 'input window, operand 0, single buffered']
    #allocation5 [shape = 's32[1]{0}', space=sflag, size = 0x4, scoped, tag = 'scoped memory for tpu_custom_call.1']
    #allocation6 [shape = 's32[1]{0}', space=sflag, size = 0x4, scoped, tag = 'scoped memory for tpu_custom_call.1']
    #allocation7 [shape = 'u8[131072]{0}', space=vmem, size = 0x20000, scoped, tag = 'input window, operand 1, single buffered']
    #allocation8 [shape = 's32[1]{0}', space=sflag, size = 0x4, scoped, tag = 'scoped memory for tpu_custom_call.1']
    #allocation9 [shape = 'u8[32768]{0}', space=vmem, size = 0x8000, scoped, tag = 'output window, operand 0, single buffered']
    %7 = vsyncpa [#allocation5], 0
    %8 = vsyncpa [#allocation8], 0
    %9 = vsyncpa [#allocation6], 0
    // Predicated region
    $region2: #{tpu_custom_call.1} parent=1 // pred_check
      _
    $region3: #{tpu_custom_call.1} parent=1 // pred_check_branch
      %11 = sbr.rel (0) target = $region5
    $region4: #{tpu_custom_call.1} parent=1 // pred_region
      %13 = vsyncadd [#allocation5], 0
      %s14 = sshll.u32 %s0, 4
      %s15 = int_to_ptr.hbm [resolvable:$true] %s14
      %s16 = sshll.u32 [#allocation4], 4
      %s17 = int_to_ptr.vmem [resolvable:$true] %s16
      %22 = dma.hbm_to_vmem [thread:$0]  %s15, 2048, %s17, [#allocation5], 256, 256, 16
    $region5: #{tpu_custom_call.1} parent=1 // pred_fallthru
      _
    // Predicated region
    $region6: #{tpu_custom_call.1} parent=1 // pred_check
      _
    $region7: #{tpu_custom_call.1} parent=1 // pred_check_branch
      %24 = sbr.rel (0) target = $region9
    $region8: #{tpu_custom_call.1} parent=1 // pred_region
      %26 = vsyncadd [#allocation8], 0
      %s27 = sshll.u32 %s1, 4
      %s28 = int_to_ptr.hbm [resolvable:$true] %s27
      %s29 = sshll.u32 [#allocation7], 4
      %s30 = int_to_ptr.vmem [resolvable:$true] %s29
      %35 = dma.hbm_to_vmem [thread:$0]  %s28, 4096, %s30, [#allocation8], 256, 256, 16
    $region9: #{tpu_custom_call.1} parent=1 // pred_fallthru
      _
    // Predicated region
    $region10: #{tpu_custom_call.1} parent=1 // pred_check
      _
    $region11: #{tpu_custom_call.1} parent=1 // pred_check_branch
      %37 = sbr.rel (0) target = $region13
    $region12: #{tpu_custom_call.1} parent=1 // pred_region
      %39 = dma.done [#allocation5], 2048
    $region13: #{tpu_custom_call.1} parent=1 // pred_fallthru
      _
    // Predicated region
    $region14: #{tpu_custom_call.1} parent=1 // pred_check
      _
    $region15: #{tpu_custom_call.1} parent=1 // pred_check_branch
      %41 = sbr.rel (0) target = $region17
    $region16: #{tpu_custom_call.1} parent=1 // pred_region
      %43 = dma.done [#allocation8], 4096
    $region17: #{tpu_custom_call.1} parent=1 // pred_fallthru
      _
    %p44 = scmp.eq.s32.totalorder 0, 0
    // Predicated region
    $region18: #{tpu_custom_call.1} parent=1 // pred_check
      %p45 = pneg %p44
    $region19: #{tpu_custom_call.1} parent=1 // pred_check_branch
      %47 = sbr.rel (%p45) target = $region21
    $region20: #{tpu_custom_call.1} parent=1 // pred_region
      %48 = vst [vmem:[#allocation2] sm:$0xff] 0.0
      %49 = vst [vmem:[#allocation3] sm:$0xff] 0.0
    $region21: #{tpu_custom_call.1} parent=1 // pred_fallthru
      _
    %v50 = vld [vmem:[#allocation7] sm:$0xff]
    %v51 = vld [vmem:[#allocation7 + $0x8] sm:$0xff]
    %v52 = vld [vmem:[#allocation7 + $0x10] sm:$0xff]
    %v53 = vld [vmem:[#allocation7 + $0x18] sm:$0xff]
    %v54 = vld [vmem:[#allocation7 + $0x20] sm:$0xff]
    %v55 = vld [vmem:[#allocation7 + $0x28] sm:$0xff]
    %v56 = vld [vmem:[#allocation7 + $0x30] sm:$0xff]
    %v57 = vld [vmem:[#allocation7 + $0x38] sm:$0xff]
    %v58 = vld [vmem:[#allocation7 + $0x40] sm:$0xff]
    %v59 = vld [vmem:[#allocation7 + $0x48] sm:$0xff]
    %v60 = vld [vmem:[#allocation7 + $0x50] sm:$0xff]
    %v61 = vld [vmem:[#allocation7 + $0x58] sm:$0xff]
    %v62 = vld [vmem:[#allocation7 + $0x60] sm:$0xff]
    %v63 = vld [vmem:[#allocation7 + $0x68] sm:$0xff]
    %v64 = vld [vmem:[#allocation7 + $0x70] sm:$0xff]
    %v65 = vld [vmem:[#allocation7 + $0x78] sm:$0xff]
    %v66 = vld [vmem:[#allocation7 + $0x80] sm:$0xff]
    %v67 = vld [vmem:[#allocation7 + $0x88] sm:$0xff]
    %v68 = vld [vmem:[#allocation7 + $0x90] sm:$0xff]
    %v69 = vld [vmem:[#allocation7 + $0x98] sm:$0xff]
    %v70 = vld [vmem:[#allocation7 + $0xa0] sm:$0xff]
    %v71 = vld [vmem:[#allocation7 + $0xa8] sm:$0xff]
    %v72 = vld [vmem:[#allocation7 + $0xb0] sm:$0xff]
    %v73 = vld [vmem:[#allocation7 + $0xb8] sm:$0xff]
    %v74 = vld [vmem:[#allocation7 + $0xc0] sm:$0xff]
    %v75 = vld [vmem:[#allocation7 + $0xc8] sm:$0xff]
    %v76 = vld [vmem:[#allocation7 + $0xd0] sm:$0xff]
    %v77 = vld [vmem:[#allocation7 + $0xd8] sm:$0xff]
    %v78 = vld [vmem:[#allocation7 + $0xe0] sm:$0xff]
    %v79 = vld [vmem:[#allocation7 + $0xe8] sm:$0xff]
    %v80 = vld [vmem:[#allocation7 + $0xf0] sm:$0xff]
    %v81 = vld [vmem:[#allocation7 + $0xf8] sm:$0xff]
    %v82 = vld [vmem:[#allocation2] sm:$0xff]
    %v83 = vld [vmem:[#allocation3] sm:$0xff]
    %v84 = vld [vmem:[#allocation4] sm:$0xff]
    %v85 = vld [vmem:[#allocation4 + $0x8] sm:$0xff]
    %v86 = vunpack.c.l.bf16 %v84
    %v87 = vunpack.c.h.bf16 %v84
    %v88 = vunpack.c.l.bf16 %v85
    %v89 = vunpack.c.h.bf16 %v85
    %v90 = vpack.c.bf16 %v82, %v82
    %v123 = vunpack.c.l.b16 %v50
    %v124 = vunpack.c.h.b16 %v50
    %v125 = vunpack.c.l.b16 %v51
    %v126 = vunpack.c.h.b16 %v51
    %v127 = vunpack.c.l.b16 %v52
    %v128 = vunpack.c.h.b16 %v52
    %v129 = vunpack.c.l.b16 %v53
    %v130 = vunpack.c.h.b16 %v53
    %v131 = vunpack.c.l.b16 %v54
    %v132 = vunpack.c.h.b16 %v54
    %v133 = vunpack.c.l.b16 %v55
    %v134 = vunpack.c.h.b16 %v55
    %v135 = vunpack.c.l.b16 %v56
    %v136 = vunpack.c.h.b16 %v56
    %v137 = vunpack.c.l.b16 %v57
    %v138 = vunpack.c.h.b16 %v57
    %v139 = vunpack.c.l.b16 %v58
    %v140 = vunpack.c.h.b16 %v58
    %v141 = vunpack.c.l.b16 %v59
    %v142 = vunpack.c.h.b16 %v59
    %v143 = vunpack.c.l.b16 %v60
    %v144 = vunpack.c.h.b16 %v60
    %v145 = vunpack.c.l.b16 %v61
    %v146 = vunpack.c.h.b16 %v61
    %v147 = vunpack.c.l.b16 %v62
    %v148 = vunpack.c.h.b16 %v62
    %v149 = vunpack.c.l.b16 %v63
    %v150 = vunpack.c.h.b16 %v63
    %v151 = vunpack.c.l.b16 %v64
    %v152 = vunpack.c.h.b16 %v64
    %v153 = vunpack.c.l.b16 %v65
    %v154 = vunpack.c.h.b16 %v65
    %v155 = vunpack.c.l.b16 %v66
    %v156 = vunpack.c.h.b16 %v66
    %v157 = vunpack.c.l.b16 %v67
    %v158 = vunpack.c.h.b16 %v67
    %v159 = vunpack.c.l.b16 %v68
    %v160 = vunpack.c.h.b16 %v68
    %v161 = vunpack.c.l.b16 %v69
    %v162 = vunpack.c.h.b16 %v69
    %v163 = vunpack.c.l.b16 %v70
    %v164 = vunpack.c.h.b16 %v70
    %v165 = vunpack.c.l.b16 %v71
    %v166 = vunpack.c.h.b16 %v71
    %v167 = vunpack.c.l.b16 %v72
    %v168 = vunpack.c.h.b16 %v72
    %v169 = vunpack.c.l.b16 %v73
    %v170 = vunpack.c.h.b16 %v73
    %v171 = vunpack.c.l.b16 %v74
    %v172 = vunpack.c.h.b16 %v74
    %v173 = vunpack.c.l.b16 %v75
    %v174 = vunpack.c.h.b16 %v75
    %v175 = vunpack.c.l.b16 %v76
    %v176 = vunpack.c.h.b16 %v76
    %v177 = vunpack.c.l.b16 %v77
    %v178 = vunpack.c.h.b16 %v77
    %v179 = vunpack.c.l.b16 %v78
    %v180 = vunpack.c.h.b16 %v78
    %v181 = vunpack.c.l.b16 %v79
    %v182 = vunpack.c.h.b16 %v79
    %v183 = vunpack.c.l.b16 %v80
    %v184 = vunpack.c.h.b16 %v80
    %v185 = vunpack.c.l.b16 %v81
    %v186 = vunpack.c.h.b16 %v81
    %v187 = vpack.c.b16 %v127, %v123
    %v188 = vpack.c.b16 %v128, %v124
    %v189 = vpack.c.b16 %v129, %v125
    %v190 = vpack.c.b16 %v130, %v126
    %v191 = vpack.c.b16 %v135, %v131
    %v192 = vpack.c.b16 %v136, %v132
    %v193 = vpack.c.b16 %v137, %v133
    %v194 = vpack.c.b16 %v138, %v134
    %v195 = vpack.c.b16 %v143, %v139
    %v196 = vpack.c.b16 %v144, %v140
    %v197 = vpack.c.b16 %v145, %v141
    %v198 = vpack.c.b16 %v146, %v142
    %v199 = vpack.c.b16 %v151, %v147
    %v200 = vpack.c.b16 %v152, %v148
    %v201 = vpack.c.b16 %v153, %v149
    %v202 = vpack.c.b16 %v154, %v150
    %v203 = vpack.c.b16 %v159, %v155
    %v204 = vpack.c.b16 %v160, %v156
    %v205 = vpack.c.b16 %v161, %v157
    %v206 = vpack.c.b16 %v162, %v158
    %v207 = vpack.c.b16 %v167, %v163
    %v208 = vpack.c.b16 %v168, %v164
    %v209 = vpack.c.b16 %v169, %v165
    %v210 = vpack.c.b16 %v170, %v166
    %v211 = vpack.c.b16 %v175, %v171
    %v212 = vpack.c.b16 %v176, %v172
    %v213 = vpack.c.b16 %v177, %v173
    %v214 = vpack.c.b16 %v178, %v174
    %v215 = vpack.c.b16 %v183, %v179
    %v216 = vpack.c.b16 %v184, %v180
    %v217 = vpack.c.b16 %v185, %v181
    %v218 = vpack.c.b16 %v186, %v182
    %251 = vmatpush.bf16.msra.mxu0 %v215
    %252 = vmatpush.bf16.msra.mxu0 %v211
    %253 = vmatpush.bf16.msra.mxu0 %v207
    %254 = vmatpush.bf16.msra.mxu0 %v203
    %255 = vmatpush.bf16.msra.mxu0 %v199
    %256 = vmatpush.bf16.msra.mxu0 %v195
    %257 = vmatpush.bf16.msra.mxu0 %v191
    %258 = vmatpush.bf16.msra.mxu0 %v187
    %259 = vmatmul.bf16.gmra.mxu0 %v90
    %v260 = vpop.f32.mrf.mxu0
    %v261 = vadd.f32 0.0, %v260
    %v262 = vpop.f32.mrf.mxu0
    %263 = vdwg.mxu0
    %264 = vmatpush.bf16.msra.mxu0 %v216
    %265 = vmatpush.bf16.msra.mxu0 %v212
    %266 = vmatpush.bf16.msra.mxu0 %v208
    %267 = vmatpush.bf16.msra.mxu0 %v204
    %268 = vmatpush.bf16.msra.mxu0 %v200
    %269 = vmatpush.bf16.msra.mxu0 %v196
    %270 = vmatpush.bf16.msra.mxu0 %v192
    %271 = vmatpush.bf16.msra.mxu0 %v188
    %272 = vmatmul.bf16.gmra.mxu0 %v90
    %v273 = vpop.f32.mrf.mxu0
    %v274 = vadd.f32 0.0, %v273
    %v275 = vpop.f32.mrf.mxu0
    %276 = vdwg.mxu0
    %277 = vmatpush.bf16.msra.mxu0 %v217
    %278 = vmatpush.bf16.msra.mxu0 %v213
    %279 = vmatpush.bf16.msra.mxu0 %v209
    %280 = vmatpush.bf16.msra.mxu0 %v205
    %281 = vmatpush.bf16.msra.mxu0 %v201
    %282 = vmatpush.bf16.msra.mxu0 %v197
    %283 = vmatpush.bf16.msra.mxu0 %v193
    %284 = vmatpush.bf16.msra.mxu0 %v189
    %285 = vmatmul.bf16.gmra.mxu0 %v90
    %v286 = vpop.f32.mrf.mxu0
    %v287 = vadd.f32 0.0, %v286
    %v288 = vpop.f32.mrf.mxu0
    %289 = vdwg.mxu0
    %290 = vmatpush.bf16.msra.mxu0 %v218
    %291 = vmatpush.bf16.msra.mxu0 %v214
    %292 = vmatpush.bf16.msra.mxu0 %v210
    %293 = vmatpush.bf16.msra.mxu0 %v206
    %294 = vmatpush.bf16.msra.mxu0 %v202
    %295 = vmatpush.bf16.msra.mxu0 %v198
    %296 = vmatpush.bf16.msra.mxu0 %v194
    %297 = vmatpush.bf16.msra.mxu0 %v190
    %298 = vmatmul.bf16.gmra.mxu0 %v90
    %v299 = vpop.f32.mrf.mxu0
    %v300 = vadd.f32 0.0, %v299
    %v301 = vpop.f32.mrf.mxu0
    %302 = vdwg.mxu0
    %v303 = vadd.f32 %v86, %v261
    %v304 = vadd.f32 %v87, %v274
    %v305 = vadd.f32 %v88, %v287
    %v306 = vadd.f32 %v89, %v300
    %v307 = vxor.u32 %v303, 2147483648
    %v308 = vmul.f32 %v307, 1.442695
    %v309 = vpow.pop %v308
    %v310 = vadd.f32 %v309, 1.0
    %v311 = vrcp.pop %v310
    %v312 = vmul.f32 %v310, %v311
    %v313 = vsub.f32 1.0, %v312
    %v314 = vmul.f32 %v311, %v313
    %v315 = vadd.f32 %v311, %v314
    %vm316 = vweird.f32 %v310
    %vm317 = vweird.f32 %v311
    %vm318 = vmor %vm316, %vm317
    %v319 = vsel %vm318, %v311, %v315
    %v320 = vand.u32 2147483647, %v310
    %vm321 = vcmp.eq.f32.partialorder %v320, 8.507059e+37
    %v322 = vand.u32 %v310, 2147483648
    %v323 = vor.u32 1.1754944e-38, %v322
    %v324 = vsel %vm321, %v323, %v319
    %v325 = vmul.f32 1.0, %v324
    %v326 = vxor.u32 %v304, 2147483648
    %v327 = vmul.f32 %v326, 1.442695
    %v328 = vpow.pop %v327
    %v329 = vadd.f32 %v328, 1.0
    %v330 = vrcp.pop %v329
    %v331 = vmul.f32 %v329, %v330
    %v332 = vsub.f32 1.0, %v331
    %v333 = vmul.f32 %v330, %v332
    %v334 = vadd.f32 %v330, %v333
    %vm335 = vweird.f32 %v329
    %vm336 = vweird.f32 %v330
    %vm337 = vmor %vm335, %vm336
    %v338 = vsel %vm337, %v330, %v334
    %v339 = vand.u32 2147483647, %v329
    %vm340 = vcmp.eq.f32.partialorder %v339, 8.507059e+37
    %v341 = vand.u32 %v329, 2147483648
    %v342 = vor.u32 1.1754944e-38, %v341
    %v343 = vsel %vm340, %v342, %v338
    %v344 = vmul.f32 1.0, %v343
    %v345 = vtanh.pop %v305
    %v346 = vxor.u32 %v306, 2147483648
    %v347 = vmul.f32 %v346, 1.442695
    %v348 = vpow.pop %v347
    %v349 = vadd.f32 %v348, 1.0
    %v350 = vrcp.pop %v349
    %v351 = vmul.f32 %v349, %v350
    %v352 = vsub.f32 1.0, %v351
    %v353 = vmul.f32 %v350, %v352
    %v354 = vadd.f32 %v350, %v353
    %vm355 = vweird.f32 %v349
    %vm356 = vweird.f32 %v350
    %vm357 = vmor %vm355, %vm356
    %v358 = vsel %vm357, %v350, %v354
    %v359 = vand.u32 2147483647, %v349
    %vm360 = vcmp.eq.f32.partialorder %v359, 8.507059e+37
    %v361 = vand.u32 %v349, 2147483648
    %v362 = vor.u32 1.1754944e-38, %v361
    %v363 = vsel %vm360, %v362, %v358
    %v364 = vmul.f32 1.0, %v363
    %v365 = vmul.f32 %v344, %v83
    %v366 = vmul.f32 %v325, %v345
    %v367 = vadd.f32 %v365, %v366
    %v368 = vtanh.pop %v367
    %v369 = vmul.f32 %v364, %v368
    %370 = vst [vmem:[#allocation9] sm:$0xff] %v369
    %s371 = scalar_lea.vmem [#allocation4], 16
    %v372 = vld [vmem:[%s371] sm:$0xff]
    %v373 = vld [vmem:[%s371 + $0x8] sm:$0xff]
    %v374 = vunpack.c.l.bf16 %v372
    %v375 = vunpack.c.h.bf16 %v372
    %v376 = vunpack.c.l.bf16 %v373
    %v377 = vunpack.c.h.bf16 %v373
    %v378 = vpack.c.bf16 %v369, %v369
    %379 = vmatpush.bf16.msra.mxu0 %v215
    %380 = vmatpush.bf16.msra.mxu0 %v211
    %381 = vmatpush.bf16.msra.mxu0 %v207
    %382 = vmatpush.bf16.msra.mxu0 %v203
    %383 = vmatpush.bf16.msra.mxu0 %v199
    %384 = vmatpush.bf16.msra.mxu0 %v195
    %385 = vmatpush.bf16.msra.mxu0 %v191
    %386 = vmatpush.bf16.msra.mxu0 %v187
    %387 = vmatmul.bf16.gmra.mxu0 %v378
    %v388 = vpop.f32.mrf.mxu0
    %v389 = vadd.f32 0.0, %v388
    %v390 = vpop.f32.mrf.mxu0
    %391 = vdwg.mxu0
    %392 = vmatpush.bf16.msra.mxu0 %v216
    %393 = vmatpush.bf16.msra.mxu0 %v212
    %394 = vmatpush.bf16.msra.mxu0 %v208
    %395 = vmatpush.bf16.msra.mxu0 %v204
    %396 = vmatpush.bf16.msra.mxu0 %v200
    %397 = vmatpush.bf16.msra.mxu0 %v196
    %398 = vmatpush.bf16.msra.mxu0 %v192
    %399 = vmatpush.bf16.msra.mxu0 %v188
    %400 = vmatmul.bf16.gmra.mxu0 %v378
    %v401 = vpop.f32.mrf.mxu0
    %v402 = vadd.f32 0.0, %v401
    %v403 = vpop.f32.mrf.mxu0
    %404 = vdwg.mxu0
    %405 = vmatpush.bf16.msra.mxu0 %v217
    %406 = vmatpush.bf16.msra.mxu0 %v213
    %407 = vmatpush.bf16.msra.mxu0 %v209
    %408 = vmatpush.bf16.msra.mxu0 %v205
    %409 = vmatpush.bf16.msra.mxu0 %v201
    %410 = vmatpush.bf16.msra.mxu0 %v197
    %411 = vmatpush.bf16.msra.mxu0 %v193
    %412 = vmatpush.bf16.msra.mxu0 %v189
    %413 = vmatmul.bf16.gmra.mxu0 %v378
    %v414 = vpop.f32.mrf.mxu0
    %v415 = vadd.f32 0.0, %v414
    %v416 = vpop.f32.mrf.mxu0
    %417 = vdwg.mxu0
    %418 = vmatpush.bf16.msra.mxu0 %v218
    %419 = vmatpush.bf16.msra.mxu0 %v214
    %420 = vmatpush.bf16.msra.mxu0 %v210
    %421 = vmatpush.bf16.msra.mxu0 %v206
    %422 = vmatpush.bf16.msra.mxu0 %v202
    %423 = vmatpush.bf16.msra.mxu0 %v198
    %424 = vmatpush.bf16.msra.mxu0 %v194
    %425 = vmatpush.bf16.msra.mxu0 %v190
    %426 = vmatmul.bf16.gmra.mxu0 %v378
    %v427 = vpop.f32.mrf.mxu0
    %v428 = vadd.f32 0.0, %v427
    %v429 = vpop.f32.mrf.mxu0
    %430 = vdwg.mxu0
    %v431 = vadd.f32 %v374, %v389
    %v432 = vadd.f32 %v375, %v402
    %v433 = vadd.f32 %v376, %v415
    %v434 = vadd.f32 %v377, %v428
    %v435 = vxor.u32 %v431, 2147483648
    %v436 = vmul.f32 %v435, 1.442695
    %v437 = vpow.pop %v436
    %v438 = vadd.f32 %v437, 1.0
    %v439 = vrcp.pop %v438
    %v440 = vmul.f32 %v438, %v439
    %v441 = vsub.f32 1.0, %v440
    %v442 = vmul.f32 %v439, %v441
    %v443 = vadd.f32 %v439, %v442
    %vm444 = vweird.f32 %v438
    %vm445 = vweird.f32 %v439
    %vm446 = vmor %vm444, %vm445
    %v447 = vsel %vm446, %v439, %v443
    %v448 = vand.u32 2147483647, %v438
    %vm449 = vcmp.eq.f32.partialorder %v448, 8.507059e+37
    %v450 = vand.u32 %v438, 2147483648
    %v451 = vor.u32 1.1754944e-38, %v450
    %v452 = vsel %vm449, %v451, %v447
    %v453 = vmul.f32 1.0, %v452
    %v454 = vxor.u32 %v432, 2147483648
    %v455 = vmul.f32 %v454, 1.442695
    %v456 = vpow.pop %v455
    %v457 = vadd.f32 %v456, 1.0
    %v458 = vrcp.pop %v457
    %v459 = vmul.f32 %v457, %v458
    %v460 = vsub.f32 1.0, %v459
    %v461 = vmul.f32 %v458, %v460
    %v462 = vadd.f32 %v458, %v461
    %vm463 = vweird.f32 %v457
    %vm464 = vweird.f32 %v458
    %vm465 = vmor %vm463, %vm464
    %v466 = vsel %vm465, %v458, %v462
    %v467 = vand.u32 2147483647, %v457
    %vm468 = vcmp.eq.f32.partialorder %v467, 8.507059e+37
    %v469 = vand.u32 %v457, 2147483648
    %v470 = vor.u32 1.1754944e-38, %v469
    %v471 = vsel %vm468, %v470, %v466
    %v472 = vmul.f32 1.0, %v471
    %v473 = vtanh.pop %v433
    %v474 = vxor.u32 %v434, 2147483648
    %v475 = vmul.f32 %v474, 1.442695
    %v476 = vpow.pop %v475
    %v477 = vadd.f32 %v476, 1.0
    %v478 = vrcp.pop %v477
    %v479 = vmul.f32 %v477, %v478
    %v480 = vsub.f32 1.0, %v479
    %v481 = vmul.f32 %v478, %v480
    %v482 = vadd.f32 %v478, %v481
    %vm483 = vweird.f32 %v477
    %vm484 = vweird.f32 %v478
    %vm485 = vmor %vm483, %vm484
    %v486 = vsel %vm485, %v478, %v482
    %v487 = vand.u32 2147483647, %v477
    %vm488 = vcmp.eq.f32.partialorder %v487, 8.507059e+37
    %v489 = vand.u32 %v477, 2147483648
    %v490 = vor.u32 1.1754944e-38, %v489
    %v491 = vsel %vm488, %v490, %v486
    %v492 = vmul.f32 1.0, %v491
    %v493 = vmul.f32 %v472, %v367
    %v494 = vmul.f32 %v453, %v473
    %v495 = vadd.f32 %v493, %v494
    %v496 = vtanh.pop %v495
    %v497 = vmul.f32 %v492, %v496
    %s498 = scalar_lea.vmem [#allocation9], 8
    %499 = vst [vmem:[%s498] sm:$0xff] %v497
    %s500 = scalar_lea.vmem [#allocation4], 32
    %v501 = vld [vmem:[%s500] sm:$0xff]
    %v502 = vld [vmem:[%s500 + $0x8] sm:$0xff]
    %v503 = vunpack.c.l.bf16 %v501
    %v504 = vunpack.c.h.bf16 %v501
    %v505 = vunpack.c.l.bf16 %v502
    %v506 = vunpack.c.h.bf16 %v502
    %v507 = vpack.c.bf16 %v497, %v497
    %508 = vmatpush.bf16.msra.mxu0 %v215
    %509 = vmatpush.bf16.msra.mxu0 %v211
    %510 = vmatpush.bf16.msra.mxu0 %v207
    %511 = vmatpush.bf16.msra.mxu0 %v203
    %512 = vmatpush.bf16.msra.mxu0 %v199
    %513 = vmatpush.bf16.msra.mxu0 %v195
    %514 = vmatpush.bf16.msra.mxu0 %v191
    %515 = vmatpush.bf16.msra.mxu0 %v187
    %516 = vmatmul.bf16.gmra.mxu0 %v507
    %v517 = vpop.f32.mrf.mxu0
    %v518 = vadd.f32 0.0, %v517
    %v519 = vpop.f32.mrf.mxu0
    %520 = vdwg.mxu0
    %521 = vmatpush.bf16.msra.mxu0 %v216
    %522 = vmatpush.bf16.msra.mxu0 %v212
    %523 = vmatpush.bf16.msra.mxu0 %v208
    %524 = vmatpush.bf16.msra.mxu0 %v204
    %525 = vmatpush.bf16.msra.mxu0 %v200
    %526 = vmatpush.bf16.msra.mxu0 %v196
    %527 = vmatpush.bf16.msra.mxu0 %v192
    %528 = vmatpush.bf16.msra.mxu0 %v188
    %529 = vmatmul.bf16.gmra.mxu0 %v507
    %v530 = vpop.f32.mrf.mxu0
    %v531 = vadd.f32 0.0, %v530
    %v532 = vpop.f32.mrf.mxu0
    %533 = vdwg.mxu0
    %534 = vmatpush.bf16.msra.mxu0 %v217
    %535 = vmatpush.bf16.msra.mxu0 %v213
    %536 = vmatpush.bf16.msra.mxu0 %v209
    %537 = vmatpush.bf16.msra.mxu0 %v205
    %538 = vmatpush.bf16.msra.mxu0 %v201
    %539 = vmatpush.bf16.msra.mxu0 %v197
    %540 = vmatpush.bf16.msra.mxu0 %v193
    %541 = vmatpush.bf16.msra.mxu0 %v189
    %542 = vmatmul.bf16.gmra.mxu0 %v507
    %v543 = vpop.f32.mrf.mxu0
    %v544 = vadd.f32 0.0, %v543
    %v545 = vpop.f32.mrf.mxu0
    %546 = vdwg.mxu0
    %547 = vmatpush.bf16.msra.mxu0 %v218
    %548 = vmatpush.bf16.msra.mxu0 %v214
    %549 = vmatpush.bf16.msra.mxu0 %v210
    %550 = vmatpush.bf16.msra.mxu0 %v206
    %551 = vmatpush.bf16.msra.mxu0 %v202
    %552 = vmatpush.bf16.msra.mxu0 %v198
    %553 = vmatpush.bf16.msra.mxu0 %v194
    %554 = vmatpush.bf16.msra.mxu0 %v190
    %555 = vmatmul.bf16.gmra.mxu0 %v507
    %v556 = vpop.f32.mrf.mxu0
    %v557 = vadd.f32 0.0, %v556
    %v558 = vpop.f32.mrf.mxu0
    %559 = vdwg.mxu0
    %v560 = vadd.f32 %v503, %v518
    %v561 = vadd.f32 %v504, %v531
    %v562 = vadd.f32 %v505, %v544
    %v563 = vadd.f32 %v506, %v557
    %v564 = vxor.u32 %v560, 2147483648
    %v565 = vmul.f32 %v564, 1.442695
    %v566 = vpow.pop %v565
    %v567 = vadd.f32 %v566, 1.0
    %v568 = vrcp.pop %v567
    %v569 = vmul.f32 %v567, %v568
    %v570 = vsub.f32 1.0, %v569
    %v571 = vmul.f32 %v568, %v570
    %v572 = vadd.f32 %v568, %v571
    %vm573 = vweird.f32 %v567
    %vm574 = vweird.f32 %v568
    %vm575 = vmor %vm573, %vm574
    %v576 = vsel %vm575, %v568, %v572
    %v577 = vand.u32 2147483647, %v567
    %vm578 = vcmp.eq.f32.partialorder %v577, 8.507059e+37
    %v579 = vand.u32 %v567, 2147483648
    %v580 = vor.u32 1.1754944e-38, %v579
    %v581 = vsel %vm578, %v580, %v576
    %v582 = vmul.f32 1.0, %v581
    %v583 = vxor.u32 %v561, 2147483648
    %v584 = vmul.f32 %v583, 1.442695
    %v585 = vpow.pop %v584
    %v586 = vadd.f32 %v585, 1.0
    %v587 = vrcp.pop %v586
    %v588 = vmul.f32 %v586, %v587
    %v589 = vsub.f32 1.0, %v588
    %v590 = vmul.f32 %v587, %v589
    %v591 = vadd.f32 %v587, %v590
    %vm592 = vweird.f32 %v586
    %vm593 = vweird.f32 %v587
    %vm594 = vmor %vm592, %vm593
    %v595 = vsel %vm594, %v587, %v591
    %v596 = vand.u32 2147483647, %v586
    %vm597 = vcmp.eq.f32.partialorder %v596, 8.507059e+37
    %v598 = vand.u32 %v586, 2147483648
    %v599 = vor.u32 1.1754944e-38, %v598
    %v600 = vsel %vm597, %v599, %v595
    %v601 = vmul.f32 1.0, %v600
    %v602 = vtanh.pop %v562
    %v603 = vxor.u32 %v563, 2147483648
    %v604 = vmul.f32 %v603, 1.442695
    %v605 = vpow.pop %v604
    %v606 = vadd.f32 %v605, 1.0
    %v607 = vrcp.pop %v606
    %v608 = vmul.f32 %v606, %v607
    %v609 = vsub.f32 1.0, %v608
    %v610 = vmul.f32 %v607, %v609
    %v611 = vadd.f32 %v607, %v610
    %vm612 = vweird.f32 %v606
    %vm613 = vweird.f32 %v607
    %vm614 = vmor %vm612, %vm613
    %v615 = vsel %vm614, %v607, %v611
    %v616 = vand.u32 2147483647, %v606
    %vm617 = vcmp.eq.f32.partialorder %v616, 8.507059e+37
    %v618 = vand.u32 %v606, 2147483648
    %v619 = vor.u32 1.1754944e-38, %v618
    %v620 = vsel %vm617, %v619, %v615
    %v621 = vmul.f32 1.0, %v620
    %v622 = vmul.f32 %v601, %v495
    %v623 = vmul.f32 %v582, %v602
    %v624 = vadd.f32 %v622, %v623
    %v625 = vtanh.pop %v624
    %v626 = vmul.f32 %v621, %v625
    %s627 = scalar_lea.vmem [#allocation9], 16
    %628 = vst [vmem:[%s627] sm:$0xff] %v626
    %s629 = scalar_lea.vmem [#allocation4], 48
    %v630 = vld [vmem:[%s629] sm:$0xff]
    %v631 = vld [vmem:[%s629 + $0x8] sm:$0xff]
    %v632 = vunpack.c.l.bf16 %v630
    %v633 = vunpack.c.h.bf16 %v630
    %v634 = vunpack.c.l.bf16 %v631
    %v635 = vunpack.c.h.bf16 %v631
    %v636 = vpack.c.bf16 %v626, %v626
    %637 = vmatpush.bf16.msra.mxu0 %v215
    %638 = vmatpush.bf16.msra.mxu0 %v211
    %639 = vmatpush.bf16.msra.mxu0 %v207
    %640 = vmatpush.bf16.msra.mxu0 %v203
    %641 = vmatpush.bf16.msra.mxu0 %v199
    %642 = vmatpush.bf16.msra.mxu0 %v195
    %643 = vmatpush.bf16.msra.mxu0 %v191
    %644 = vmatpush.bf16.msra.mxu0 %v187
    %645 = vmatmul.bf16.gmra.mxu0 %v636
    %v646 = vpop.f32.mrf.mxu0
    %v647 = vadd.f32 0.0, %v646
    %v648 = vpop.f32.mrf.mxu0
    %649 = vdwg.mxu0
    %650 = vmatpush.bf16.msra.mxu0 %v216
    %651 = vmatpush.bf16.msra.mxu0 %v212
    %652 = vmatpush.bf16.msra.mxu0 %v208
    %653 = vmatpush.bf16.msra.mxu0 %v204
    %654 = vmatpush.bf16.msra.mxu0 %v200
    %655 = vmatpush.bf16.msra.mxu0 %v196
    %656 = vmatpush.bf16.msra.mxu0 %v192
    %657 = vmatpush.bf16.msra.mxu0 %v188
    %658 = vmatmul.bf16.gmra.mxu0 %v636
    %v659 = vpop.f32.mrf.mxu0
    %v660 = vadd.f32 0.0, %v659
    %v661 = vpop.f32.mrf.mxu0
    %662 = vdwg.mxu0
    %663 = vmatpush.bf16.msra.mxu0 %v217
    %664 = vmatpush.bf16.msra.mxu0 %v213
    %665 = vmatpush.bf16.msra.mxu0 %v209
    %666 = vmatpush.bf16.msra.mxu0 %v205
    %667 = vmatpush.bf16.msra.mxu0 %v201
    %668 = vmatpush.bf16.msra.mxu0 %v197
    %669 = vmatpush.bf16.msra.mxu0 %v193
    %670 = vmatpush.bf16.msra.mxu0 %v189
    %671 = vmatmul.bf16.gmra.mxu0 %v636
    %v672 = vpop.f32.mrf.mxu0
    %v673 = vadd.f32 0.0, %v672
    %v674 = vpop.f32.mrf.mxu0
    %675 = vdwg.mxu0
    %676 = vmatpush.bf16.msra.mxu0 %v218
    %677 = vmatpush.bf16.msra.mxu0 %v214
    %678 = vmatpush.bf16.msra.mxu0 %v210
    %679 = vmatpush.bf16.msra.mxu0 %v206
    %680 = vmatpush.bf16.msra.mxu0 %v202
    %681 = vmatpush.bf16.msra.mxu0 %v198
    %682 = vmatpush.bf16.msra.mxu0 %v194
    %683 = vmatpush.bf16.msra.mxu0 %v190
    %684 = vmatmul.bf16.gmra.mxu0 %v636
    %v685 = vpop.f32.mrf.mxu0
    %v686 = vadd.f32 0.0, %v685
    %v687 = vpop.f32.mrf.mxu0
    %688 = vdwg.mxu0
    %v689 = vadd.f32 %v632, %v647
    %v690 = vadd.f32 %v633, %v660
    %v691 = vadd.f32 %v634, %v673
    %v692 = vadd.f32 %v635, %v686
    %v693 = vxor.u32 %v689, 2147483648
    %v694 = vmul.f32 %v693, 1.442695
    %v695 = vpow.pop %v694
    %v696 = vadd.f32 %v695, 1.0
    %v697 = vrcp.pop %v696
    %v698 = vmul.f32 %v696, %v697
    %v699 = vsub.f32 1.0, %v698
    %v700 = vmul.f32 %v697, %v699
    %v701 = vadd.f32 %v697, %v700
    %vm702 = vweird.f32 %v696
    %vm703 = vweird.f32 %v697
    %vm704 = vmor %vm702, %vm703
    %v705 = vsel %vm704, %v697, %v701
    %v706 = vand.u32 2147483647, %v696
    %vm707 = vcmp.eq.f32.partialorder %v706, 8.507059e+37
    %v708 = vand.u32 %v696, 2147483648
    %v709 = vor.u32 1.1754944e-38, %v708
    %v710 = vsel %vm707, %v709, %v705
    %v711 = vmul.f32 1.0, %v710
    %v712 = vxor.u32 %v690, 2147483648
    %v713 = vmul.f32 %v712, 1.442695
    %v714 = vpow.pop %v713
    %v715 = vadd.f32 %v714, 1.0
    %v716 = vrcp.pop %v715
    %v717 = vmul.f32 %v715, %v716
    %v718 = vsub.f32 1.0, %v717
    %v719 = vmul.f32 %v716, %v718
    %v720 = vadd.f32 %v716, %v719
    %vm721 = vweird.f32 %v715
    %vm722 = vweird.f32 %v716
    %vm723 = vmor %vm721, %vm722
    %v724 = vsel %vm723, %v716, %v720
    %v725 = vand.u32 2147483647, %v715
    %vm726 = vcmp.eq.f32.partialorder %v725, 8.507059e+37
    %v727 = vand.u32 %v715, 2147483648
    %v728 = vor.u32 1.1754944e-38, %v727
    %v729 = vsel %vm726, %v728, %v724
    %v730 = vmul.f32 1.0, %v729
    %v731 = vtanh.pop %v691
    %v732 = vxor.u32 %v692, 2147483648
    %v733 = vmul.f32 %v732, 1.442695
    %v734 = vpow.pop %v733
    %v735 = vadd.f32 %v734, 1.0
    %v736 = vrcp.pop %v735
    %v737 = vmul.f32 %v735, %v736
    %v738 = vsub.f32 1.0, %v737
    %v739 = vmul.f32 %v736, %v738
    %v740 = vadd.f32 %v736, %v739
    %vm741 = vweird.f32 %v735
    %vm742 = vweird.f32 %v736
    %vm743 = vmor %vm741, %vm742
    %v744 = vsel %vm743, %v736, %v740
    %v745 = vand.u32 2147483647, %v735
    %vm746 = vcmp.eq.f32.partialorder %v745, 8.507059e+37
    %v747 = vand.u32 %v735, 2147483648
    %v748 = vor.u32 1.1754944e-38, %v747
    %v749 = vsel %vm746, %v748, %v744
    %v750 = vmul.f32 1.0, %v749
    %v751 = vmul.f32 %v730, %v624
    %v752 = vmul.f32 %v711, %v731
    %v753 = vadd.f32 %v751, %v752
    %v754 = vtanh.pop %v753
    %v755 = vmul.f32 %v750, %v754
    %s756 = scalar_lea.vmem [#allocation9], 24
    %757 = vst [vmem:[%s756] sm:$0xff] %v755
    %s758 = scalar_lea.vmem [#allocation4], 64
    %v759 = vld [vmem:[%s758] sm:$0xff]
    %v760 = vld [vmem:[%s758 + $0x8] sm:$0xff]
    %v761 = vunpack.c.l.bf16 %v759
    %v762 = vunpack.c.h.bf16 %v759
    %v763 = vunpack.c.l.bf16 %v760
    %v764 = vunpack.c.h.bf16 %v760
    %v765 = vpack.c.bf16 %v755, %v755
    %766 = vmatpush.bf16.msra.mxu0 %v215
    %767 = vmatpush.bf16.msra.mxu0 %v211
    %768 = vmatpush.bf16.msra.mxu0 %v207
    %769 = vmatpush.bf16.msra.mxu0 %v203
    %770 = vmatpush.bf16.msra.mxu0 %v199
    %771 = vmatpush.bf16.msra.mxu0 %v195
    %772 = vmatpush.bf16.msra.mxu0 %v191
    %773 = vmatpush.bf16.msra.mxu0 %v187
    %774 = vmatmul.bf16.gmra.mxu0 %v765
    %v775 = vpop.f32.mrf.mxu0
    %v776 = vadd.f32 0.0, %v775
    %v777 = vpop.f32.mrf.mxu0
    %778 = vdwg.mxu0
    %779 = vmatpush.bf16.msra.mxu0 %v216
    %780 = vmatpush.bf16.msra.mxu0 %v212
    %781 = vmatpush.bf16.msra.mxu0 %v208
    %782 = vmatpush.bf16.msra.mxu0 %v204
    %783 = vmatpush.bf16.msra.mxu0 %v200
    %784 = vmatpush.bf16.msra.mxu0 %v196
    %785 = vmatpush.bf16.msra.mxu0 %v192
    %786 = vmatpush.bf16.msra.mxu0 %v188
    %787 = vmatmul.bf16.gmra.mxu0 %v765
    %v788 = vpop.f32.mrf.mxu0
    %v789 = vadd.f32 0.0, %v788
    %v790 = vpop.f32.mrf.mxu0
    %791 = vdwg.mxu0
    %792 = vmatpush.bf16.msra.mxu0 %v217
    %793 = vmatpush.bf16.msra.mxu0 %v213
    %794 = vmatpush.bf16.msra.mxu0 %v209
    %795 = vmatpush.bf16.msra.mxu0 %v205
    %796 = vmatpush.bf16.msra.mxu0 %v201
    %797 = vmatpush.bf16.msra.mxu0 %v197
    %798 = vmatpush.bf16.msra.mxu0 %v193
    %799 = vmatpush.bf16.msra.mxu0 %v189
    %800 = vmatmul.bf16.gmra.mxu0 %v765
    %v801 = vpop.f32.mrf.mxu0
    %v802 = vadd.f32 0.0, %v801
    %v803 = vpop.f32.mrf.mxu0
    %804 = vdwg.mxu0
    %805 = vmatpush.bf16.msra.mxu0 %v218
    %806 = vmatpush.bf16.msra.mxu0 %v214
    %807 = vmatpush.bf16.msra.mxu0 %v210
    %808 = vmatpush.bf16.msra.mxu0 %v206
    %809 = vmatpush.bf16.msra.mxu0 %v202
    %810 = vmatpush.bf16.msra.mxu0 %v198
    %811 = vmatpush.bf16.msra.mxu0 %v194
    %812 = vmatpush.bf16.msra.mxu0 %v190
    %813 = vmatmul.bf16.gmra.mxu0 %v765
    %v814 = vpop.f32.mrf.mxu0
    %v815 = vadd.f32 0.0, %v814
    %v816 = vpop.f32.mrf.mxu0
    %817 = vdwg.mxu0
    %v818 = vadd.f32 %v761, %v776
    %v819 = vadd.f32 %v762, %v789
    %v820 = vadd.f32 %v763, %v802
    %v821 = vadd.f32 %v764, %v815
    %v822 = vxor.u32 %v818, 2147483648
    %v823 = vmul.f32 %v822, 1.442695
    %v824 = vpow.pop %v823
    %v825 = vadd.f32 %v824, 1.0
    %v826 = vrcp.pop %v825
    %v827 = vmul.f32 %v825, %v826
    %v828 = vsub.f32 1.0, %v827
    %v829 = vmul.f32 %v826, %v828
    %v830 = vadd.f32 %v826, %v829
    %vm831 = vweird.f32 %v825
    %vm832 = vweird.f32 %v826
    %vm833 = vmor %vm831, %vm832
    %v834 = vsel %vm833, %v826, %v830
    %v835 = vand.u32 2147483647, %v825
    %vm836 = vcmp.eq.f32.partialorder %v835, 8.507059e+37
    %v837 = vand.u32 %v825, 2147483648
    %v838 = vor.u32 1.1754944e-38, %v837
    %v839 = vsel %vm836, %v838, %v834
    %v840 = vmul.f32 1.0, %v839
    %v841 = vxor.u32 %v819, 2147483648
    %v842 = vmul.f32 %v841, 1.442695
    %v843 = vpow.pop %v842
    %v844 = vadd.f32 %v843, 1.0
    %v845 = vrcp.pop %v844
    %v846 = vmul.f32 %v844, %v845
    %v847 = vsub.f32 1.0, %v846
    %v848 = vmul.f32 %v845, %v847
    %v849 = vadd.f32 %v845, %v848
    %vm850 = vweird.f32 %v844
    %vm851 = vweird.f32 %v845
    %vm852 = vmor %vm850, %vm851
    %v853 = vsel %vm852, %v845, %v849
    %v854 = vand.u32 2147483647, %v844
    %vm855 = vcmp.eq.f32.partialorder %v854, 8.507059e+37
    %v856 = vand.u32 %v844, 2147483648
    %v857 = vor.u32 1.1754944e-38, %v856
    %v858 = vsel %vm855, %v857, %v853
    %v859 = vmul.f32 1.0, %v858
    %v860 = vtanh.pop %v820
    %v861 = vxor.u32 %v821, 2147483648
    %v862 = vmul.f32 %v861, 1.442695
    %v863 = vpow.pop %v862
    %v864 = vadd.f32 %v863, 1.0
    %v865 = vrcp.pop %v864
    %v866 = vmul.f32 %v864, %v865
    %v867 = vsub.f32 1.0, %v866
    %v868 = vmul.f32 %v865, %v867
    %v869 = vadd.f32 %v865, %v868
    %vm870 = vweird.f32 %v864
    %vm871 = vweird.f32 %v865
    %vm872 = vmor %vm870, %vm871
    %v873 = vsel %vm872, %v865, %v869
    %v874 = vand.u32 2147483647, %v864
    %vm875 = vcmp.eq.f32.partialorder %v874, 8.507059e+37
    %v876 = vand.u32 %v864, 2147483648
    %v877 = vor.u32 1.1754944e-38, %v876
    %v878 = vsel %vm875, %v877, %v873
    %v879 = vmul.f32 1.0, %v878
    %v880 = vmul.f32 %v859, %v753
    %v881 = vmul.f32 %v840, %v860
    %v882 = vadd.f32 %v880, %v881
    %v883 = vtanh.pop %v882
    %v884 = vmul.f32 %v879, %v883
    %s885 = scalar_lea.vmem [#allocation9], 32
    %886 = vst [vmem:[%s885] sm:$0xff] %v884
    %s887 = scalar_lea.vmem [#allocation4], 80
    %v888 = vld [vmem:[%s887] sm:$0xff]
    %v889 = vld [vmem:[%s887 + $0x8] sm:$0xff]
    %v890 = vunpack.c.l.bf16 %v888
    %v891 = vunpack.c.h.bf16 %v888
    %v892 = vunpack.c.l.bf16 %v889
    %v893 = vunpack.c.h.bf16 %v889
    %v894 = vpack.c.bf16 %v884, %v884
    %895 = vmatpush.bf16.msra.mxu0 %v215
    %896 = vmatpush.bf16.msra.mxu0 %v211
    %897 = vmatpush.bf16.msra.mxu0 %v207
    %898 = vmatpush.bf16.msra.mxu0 %v203
    %899 = vmatpush.bf16.msra.mxu0 %v199
    %900 = vmatpush.bf16.msra.mxu0 %v195
    %901 = vmatpush.bf16.msra.mxu0 %v191
    %902 = vmatpush.bf16.msra.mxu0 %v187
    %903 = vmatmul.bf16.gmra.mxu0 %v894
    %v904 = vpop.f32.mrf.mxu0
    %v905 = vadd.f32 0.0, %v904
    %v906 = vpop.f32.mrf.mxu0
    %907 = vdwg.mxu0
    %908 = vmatpush.bf16.msra.mxu0 %v216
    %909 = vmatpush.bf16.msra.mxu0 %v212
    %910 = vmatpush.bf16.msra.mxu0 %v208
    %911 = vmatpush.bf16.msra.mxu0 %v204
    %912 = vmatpush.bf16.msra.mxu0 %v200
    %913 = vmatpush.bf16.msra.mxu0 %v196
    %914 = vmatpush.bf16.msra.mxu0 %v192
    %915 = vmatpush.bf16.msra.mxu0 %v188
    %916 = vmatmul.bf16.gmra.mxu0 %v894
    %v917 = vpop.f32.mrf.mxu0
    %v918 = vadd.f32 0.0, %v917
    %v919 = vpop.f32.mrf.mxu0
    %920 = vdwg.mxu0
    %921 = vmatpush.bf16.msra.mxu0 %v217
    %922 = vmatpush.bf16.msra.mxu0 %v213
    %923 = vmatpush.bf16.msra.mxu0 %v209
    %924 = vmatpush.bf16.msra.mxu0 %v205
    %925 = vmatpush.bf16.msra.mxu0 %v201
    %926 = vmatpush.bf16.msra.mxu0 %v197
    %927 = vmatpush.bf16.msra.mxu0 %v193
    %928 = vmatpush.bf16.msra.mxu0 %v189
    %929 = vmatmul.bf16.gmra.mxu0 %v894
    %v930 = vpop.f32.mrf.mxu0
    %v931 = vadd.f32 0.0, %v930
    %v932 = vpop.f32.mrf.mxu0
    %933 = vdwg.mxu0
    %934 = vmatpush.bf16.msra.mxu0 %v218
    %935 = vmatpush.bf16.msra.mxu0 %v214
    %936 = vmatpush.bf16.msra.mxu0 %v210
    %937 = vmatpush.bf16.msra.mxu0 %v206
    %938 = vmatpush.bf16.msra.mxu0 %v202
    %939 = vmatpush.bf16.msra.mxu0 %v198
    %940 = vmatpush.bf16.msra.mxu0 %v194
    %941 = vmatpush.bf16.msra.mxu0 %v190
    %942 = vmatmul.bf16.gmra.mxu0 %v894
    %v943 = vpop.f32.mrf.mxu0
    %v944 = vadd.f32 0.0, %v943
    %v945 = vpop.f32.mrf.mxu0
    %946 = vdwg.mxu0
    %v947 = vadd.f32 %v890, %v905
    %v948 = vadd.f32 %v891, %v918
    %v949 = vadd.f32 %v892, %v931
    %v950 = vadd.f32 %v893, %v944
    %v951 = vxor.u32 %v947, 2147483648
    %v952 = vmul.f32 %v951, 1.442695
    %v953 = vpow.pop %v952
    %v954 = vadd.f32 %v953, 1.0
    %v955 = vrcp.pop %v954
    %v956 = vmul.f32 %v954, %v955
    %v957 = vsub.f32 1.0, %v956
    %v958 = vmul.f32 %v955, %v957
    %v959 = vadd.f32 %v955, %v958
    %vm960 = vweird.f32 %v954
    %vm961 = vweird.f32 %v955
    %vm962 = vmor %vm960, %vm961
    %v963 = vsel %vm962, %v955, %v959
    %v964 = vand.u32 2147483647, %v954
    %vm965 = vcmp.eq.f32.partialorder %v964, 8.507059e+37
    %v966 = vand.u32 %v954, 2147483648
    %v967 = vor.u32 1.1754944e-38, %v966
    %v968 = vsel %vm965, %v967, %v963
    %v969 = vmul.f32 1.0, %v968
    %v970 = vxor.u32 %v948, 2147483648
    %v971 = vmul.f32 %v970, 1.442695
    %v972 = vpow.pop %v971
    %v973 = vadd.f32 %v972, 1.0
    %v974 = vrcp.pop %v973
    %v975 = vmul.f32 %v973, %v974
    %v976 = vsub.f32 1.0, %v975
    %v977 = vmul.f32 %v974, %v976
    %v978 = vadd.f32 %v974, %v977
    %vm979 = vweird.f32 %v973
    %vm980 = vweird.f32 %v974
    %vm981 = vmor %vm979, %vm980
    %v982 = vsel %vm981, %v974, %v978
    %v983 = vand.u32 2147483647, %v973
    %vm984 = vcmp.eq.f32.partialorder %v983, 8.507059e+37
    %v985 = vand.u32 %v973, 2147483648
    %v986 = vor.u32 1.1754944e-38, %v985
    %v987 = vsel %vm984, %v986, %v982
    %v988 = vmul.f32 1.0, %v987
    %v989 = vtanh.pop %v949
    %v990 = vxor.u32 %v950, 2147483648
    %v991 = vmul.f32 %v990, 1.442695
    %v992 = vpow.pop %v991
    %v993 = vadd.f32 %v992, 1.0
    %v994 = vrcp.pop %v993
    %v995 = vmul.f32 %v993, %v994
    %v996 = vsub.f32 1.0, %v995
    %v997 = vmul.f32 %v994, %v996
    %v998 = vadd.f32 %v994, %v997
    %vm999 = vweird.f32 %v993
    %vm1000 = vweird.f32 %v994
    %vm1001 = vmor %vm999, %vm1000
    %v1002 = vsel %vm1001, %v994, %v998
    %v1003 = vand.u32 2147483647, %v993
    %vm1004 = vcmp.eq.f32.partialorder %v1003, 8.507059e+37
    %v1005 = vand.u32 %v993, 2147483648
    %v1006 = vor.u32 1.1754944e-38, %v1005
    %v1007 = vsel %vm1004, %v1006, %v1002
    %v1008 = vmul.f32 1.0, %v1007
    %v1009 = vmul.f32 %v988, %v882
    %v1010 = vmul.f32 %v969, %v989
    %v1011 = vadd.f32 %v1009, %v1010
    %v1012 = vtanh.pop %v1011
    %v1013 = vmul.f32 %v1008, %v1012
    %s1014 = scalar_lea.vmem [#allocation9], 40
    %1015 = vst [vmem:[%s1014] sm:$0xff] %v1013
    %s1016 = scalar_lea.vmem [#allocation4], 96
    %v1017 = vld [vmem:[%s1016] sm:$0xff]
    %v1018 = vld [vmem:[%s1016 + $0x8] sm:$0xff]
    %v1019 = vunpack.c.l.bf16 %v1017
    %v1020 = vunpack.c.h.bf16 %v1017
    %v1021 = vunpack.c.l.bf16 %v1018
    %v1022 = vunpack.c.h.bf16 %v1018
    %v1023 = vpack.c.bf16 %v1013, %v1013
    %1024 = vmatpush.bf16.msra.mxu0 %v215
    %1025 = vmatpush.bf16.msra.mxu0 %v211
    %1026 = vmatpush.bf16.msra.mxu0 %v207
    %1027 = vmatpush.bf16.msra.mxu0 %v203
    %1028 = vmatpush.bf16.msra.mxu0 %v199
    %1029 = vmatpush.bf16.msra.mxu0 %v195
    %1030 = vmatpush.bf16.msra.mxu0 %v191
    %1031 = vmatpush.bf16.msra.mxu0 %v187
    %1032 = vmatmul.bf16.gmra.mxu0 %v1023
    %v1033 = vpop.f32.mrf.mxu0
    %v1034 = vadd.f32 0.0, %v1033
    %v1035 = vpop.f32.mrf.mxu0
    %1036 = vdwg.mxu0
    %1037 = vmatpush.bf16.msra.mxu0 %v216
    %1038 = vmatpush.bf16.msra.mxu0 %v212
    %1039 = vmatpush.bf16.msra.mxu0 %v208
    %1040 = vmatpush.bf16.msra.mxu0 %v204
    %1041 = vmatpush.bf16.msra.mxu0 %v200
    %1042 = vmatpush.bf16.msra.mxu0 %v196
    %1043 = vmatpush.bf16.msra.mxu0 %v192
    %1044 = vmatpush.bf16.msra.mxu0 %v188
    %1045 = vmatmul.bf16.gmra.mxu0 %v1023
    %v1046 = vpop.f32.mrf.mxu0
    %v1047 = vadd.f32 0.0, %v1046
    %v1048 = vpop.f32.mrf.mxu0
    %1049 = vdwg.mxu0
    %1050 = vmatpush.bf16.msra.mxu0 %v217
    %1051 = vmatpush.bf16.msra.mxu0 %v213
    %1052 = vmatpush.bf16.msra.mxu0 %v209
    %1053 = vmatpush.bf16.msra.mxu0 %v205
    %1054 = vmatpush.bf16.msra.mxu0 %v201
    %1055 = vmatpush.bf16.msra.mxu0 %v197
    %1056 = vmatpush.bf16.msra.mxu0 %v193
    %1057 = vmatpush.bf16.msra.mxu0 %v189
    %1058 = vmatmul.bf16.gmra.mxu0 %v1023
    %v1059 = vpop.f32.mrf.mxu0
    %v1060 = vadd.f32 0.0, %v1059
    %v1061 = vpop.f32.mrf.mxu0
    %1062 = vdwg.mxu0
    %1063 = vmatpush.bf16.msra.mxu0 %v218
    %1064 = vmatpush.bf16.msra.mxu0 %v214
    %1065 = vmatpush.bf16.msra.mxu0 %v210
    %1066 = vmatpush.bf16.msra.mxu0 %v206
    %1067 = vmatpush.bf16.msra.mxu0 %v202
    %1068 = vmatpush.bf16.msra.mxu0 %v198
    %1069 = vmatpush.bf16.msra.mxu0 %v194
    %1070 = vmatpush.bf16.msra.mxu0 %v190
    %1071 = vmatmul.bf16.gmra.mxu0 %v1023
    %v1072 = vpop.f32.mrf.mxu0
    %v1073 = vadd.f32 0.0, %v1072
    %v1074 = vpop.f32.mrf.mxu0
    %1075 = vdwg.mxu0
    %v1076 = vadd.f32 %v1019, %v1034
    %v1077 = vadd.f32 %v1020, %v1047
    %v1078 = vadd.f32 %v1021, %v1060
    %v1079 = vadd.f32 %v1022, %v1073
    %v1080 = vxor.u32 %v1076, 2147483648
    %v1081 = vmul.f32 %v1080, 1.442695
    %v1082 = vpow.pop %v1081
    %v1083 = vadd.f32 %v1082, 1.0
    %v1084 = vrcp.pop %v1083
    %v1085 = vmul.f32 %v1083, %v1084
    %v1086 = vsub.f32 1.0, %v1085
    %v1087 = vmul.f32 %v1084, %v1086
    %v1088 = vadd.f32 %v1084, %v1087
    %vm1089 = vweird.f32 %v1083
    %vm1090 = vweird.f32 %v1084
    %vm1091 = vmor %vm1089, %vm1090
    %v1092 = vsel %vm1091, %v1084, %v1088
    %v1093 = vand.u32 2147483647, %v1083
    %vm1094 = vcmp.eq.f32.partialorder %v1093, 8.507059e+37
    %v1095 = vand.u32 %v1083, 2147483648
    %v1096 = vor.u32 1.1754944e-38, %v1095
    %v1097 = vsel %vm1094, %v1096, %v1092
    %v1098 = vmul.f32 1.0, %v1097
    %v1099 = vxor.u32 %v1077, 2147483648
    %v1100 = vmul.f32 %v1099, 1.442695
    %v1101 = vpow.pop %v1100
    %v1102 = vadd.f32 %v1101, 1.0
    %v1103 = vrcp.pop %v1102
    %v1104 = vmul.f32 %v1102, %v1103
    %v1105 = vsub.f32 1.0, %v1104
    %v1106 = vmul.f32 %v1103, %v1105
    %v1107 = vadd.f32 %v1103, %v1106
    %vm1108 = vweird.f32 %v1102
    %vm1109 = vweird.f32 %v1103
    %vm1110 = vmor %vm1108, %vm1109
    %v1111 = vsel %vm1110, %v1103, %v1107
    %v1112 = vand.u32 2147483647, %v1102
    %vm1113 = vcmp.eq.f32.partialorder %v1112, 8.507059e+37
    %v1114 = vand.u32 %v1102, 2147483648
    %v1115 = vor.u32 1.1754944e-38, %v1114
    %v1116 = vsel %vm1113, %v1115, %v1111
    %v1117 = vmul.f32 1.0, %v1116
    %v1118 = vtanh.pop %v1078
    %v1119 = vxor.u32 %v1079, 2147483648
    %v1120 = vmul.f32 %v1119, 1.442695
    %v1121 = vpow.pop %v1120
    %v1122 = vadd.f32 %v1121, 1.0
    %v1123 = vrcp.pop %v1122
    %v1124 = vmul.f32 %v1122, %v1123
    %v1125 = vsub.f32 1.0, %v1124
    %v1126 = vmul.f32 %v1123, %v1125
    %v1127 = vadd.f32 %v1123, %v1126
    %vm1128 = vweird.f32 %v1122
    %vm1129 = vweird.f32 %v1123
    %vm1130 = vmor %vm1128, %vm1129
    %v1131 = vsel %vm1130, %v1123, %v1127
    %v1132 = vand.u32 2147483647, %v1122
    %vm1133 = vcmp.eq.f32.partialorder %v1132, 8.507059e+37
    %v1134 = vand.u32 %v1122, 2147483648
    %v1135 = vor.u32 1.1754944e-38, %v1134
    %v1136 = vsel %vm1133, %v1135, %v1131
    %v1137 = vmul.f32 1.0, %v1136
    %v1138 = vmul.f32 %v1117, %v1011
    %v1139 = vmul.f32 %v1098, %v1118
    %v1140 = vadd.f32 %v1138, %v1139
    %v1141 = vtanh.pop %v1140
    %v1142 = vmul.f32 %v1137, %v1141
    %s1143 = scalar_lea.vmem [#allocation9], 48
    %1144 = vst [vmem:[%s1143] sm:$0xff] %v1142
    %s1145 = scalar_lea.vmem [#allocation4], 112
    %v1146 = vld [vmem:[%s1145] sm:$0xff]
    %v1147 = vld [vmem:[%s1145 + $0x8] sm:$0xff]
    %v1148 = vunpack.c.l.bf16 %v1146
    %v1149 = vunpack.c.h.bf16 %v1146
    %v1150 = vunpack.c.l.bf16 %v1147
    %v1151 = vunpack.c.h.bf16 %v1147
    %v1152 = vpack.c.bf16 %v1142, %v1142
    %1153 = vmatpush.bf16.msra.mxu0 %v215
    %1154 = vmatpush.bf16.msra.mxu0 %v211
    %1155 = vmatpush.bf16.msra.mxu0 %v207
    %1156 = vmatpush.bf16.msra.mxu0 %v203
    %1157 = vmatpush.bf16.msra.mxu0 %v199
    %1158 = vmatpush.bf16.msra.mxu0 %v195
    %1159 = vmatpush.bf16.msra.mxu0 %v191
    %1160 = vmatpush.bf16.msra.mxu0 %v187
    %1161 = vmatmul.bf16.gmra.mxu0 %v1152
    %v1162 = vpop.f32.mrf.mxu0
    %v1163 = vadd.f32 0.0, %v1162
    %v1164 = vpop.f32.mrf.mxu0
    %1165 = vdwg.mxu0
    %1166 = vmatpush.bf16.msra.mxu0 %v216
    %1167 = vmatpush.bf16.msra.mxu0 %v212
    %1168 = vmatpush.bf16.msra.mxu0 %v208
    %1169 = vmatpush.bf16.msra.mxu0 %v204
    %1170 = vmatpush.bf16.msra.mxu0 %v200
    %1171 = vmatpush.bf16.msra.mxu0 %v196
    %1172 = vmatpush.bf16.msra.mxu0 %v192
    %1173 = vmatpush.bf16.msra.mxu0 %v188
    %1174 = vmatmul.bf16.gmra.mxu0 %v1152
    %v1175 = vpop.f32.mrf.mxu0
    %v1176 = vadd.f32 0.0, %v1175
    %v1177 = vpop.f32.mrf.mxu0
    %1178 = vdwg.mxu0
    %1179 = vmatpush.bf16.msra.mxu0 %v217
    %1180 = vmatpush.bf16.msra.mxu0 %v213
    %1181 = vmatpush.bf16.msra.mxu0 %v209
    %1182 = vmatpush.bf16.msra.mxu0 %v205
    %1183 = vmatpush.bf16.msra.mxu0 %v201
    %1184 = vmatpush.bf16.msra.mxu0 %v197
    %1185 = vmatpush.bf16.msra.mxu0 %v193
    %1186 = vmatpush.bf16.msra.mxu0 %v189
    %1187 = vmatmul.bf16.gmra.mxu0 %v1152
    %v1188 = vpop.f32.mrf.mxu0
    %v1189 = vadd.f32 0.0, %v1188
    %v1190 = vpop.f32.mrf.mxu0
    %1191 = vdwg.mxu0
    %1192 = vmatpush.bf16.msra.mxu0 %v218
    %1193 = vmatpush.bf16.msra.mxu0 %v214
    %1194 = vmatpush.bf16.msra.mxu0 %v210
    %1195 = vmatpush.bf16.msra.mxu0 %v206
    %1196 = vmatpush.bf16.msra.mxu0 %v202
    %1197 = vmatpush.bf16.msra.mxu0 %v198
    %1198 = vmatpush.bf16.msra.mxu0 %v194
    %1199 = vmatpush.bf16.msra.mxu0 %v190
    %1200 = vmatmul.bf16.gmra.mxu0 %v1152
    %v1201 = vpop.f32.mrf.mxu0
    %v1202 = vadd.f32 0.0, %v1201
    %v1203 = vpop.f32.mrf.mxu0
    %1204 = vdwg.mxu0
    %v1205 = vadd.f32 %v1148, %v1163
    %v1206 = vadd.f32 %v1149, %v1176
    %v1207 = vadd.f32 %v1150, %v1189
    %v1208 = vadd.f32 %v1151, %v1202
    %v1209 = vxor.u32 %v1205, 2147483648
    %v1210 = vmul.f32 %v1209, 1.442695
    %v1211 = vpow.pop %v1210
    %v1212 = vadd.f32 %v1211, 1.0
    %v1213 = vrcp.pop %v1212
    %v1214 = vmul.f32 %v1212, %v1213
    %v1215 = vsub.f32 1.0, %v1214
    %v1216 = vmul.f32 %v1213, %v1215
    %v1217 = vadd.f32 %v1213, %v1216
    %vm1218 = vweird.f32 %v1212
    %vm1219 = vweird.f32 %v1213
    %vm1220 = vmor %vm1218, %vm1219
    %v1221 = vsel %vm1220, %v1213, %v1217
    %v1222 = vand.u32 2147483647, %v1212
    %vm1223 = vcmp.eq.f32.partialorder %v1222, 8.507059e+37
    %v1224 = vand.u32 %v1212, 2147483648
    %v1225 = vor.u32 1.1754944e-38, %v1224
    %v1226 = vsel %vm1223, %v1225, %v1221
    %v1227 = vmul.f32 1.0, %v1226
    %v1228 = vxor.u32 %v1206, 2147483648
    %v1229 = vmul.f32 %v1228, 1.442695
    %v1230 = vpow.pop %v1229
    %v1231 = vadd.f32 %v1230, 1.0
    %v1232 = vrcp.pop %v1231
    %v1233 = vmul.f32 %v1231, %v1232
    %v1234 = vsub.f32 1.0, %v1233
    %v1235 = vmul.f32 %v1232, %v1234
    %v1236 = vadd.f32 %v1232, %v1235
    %vm1237 = vweird.f32 %v1231
    %vm1238 = vweird.f32 %v1232
    %vm1239 = vmor %vm1237, %vm1238
    %v1240 = vsel %vm1239, %v1232, %v1236
    %v1241 = vand.u32 2147483647, %v1231
    %vm1242 = vcmp.eq.f32.partialorder %v1241, 8.507059e+37
    %v1243 = vand.u32 %v1231, 2147483648
    %v1244 = vor.u32 1.1754944e-38, %v1243
    %v1245 = vsel %vm1242, %v1244, %v1240
    %v1246 = vmul.f32 1.0, %v1245
    %v1247 = vtanh.pop %v1207
    %v1248 = vxor.u32 %v1208, 2147483648
    %v1249 = vmul.f32 %v1248, 1.442695
    %v1250 = vpow.pop %v1249
    %v1251 = vadd.f32 %v1250, 1.0
    %v1252 = vrcp.pop %v1251
    %v1253 = vmul.f32 %v1251, %v1252
    %v1254 = vsub.f32 1.0, %v1253
    %v1255 = vmul.f32 %v1252, %v1254
    %v1256 = vadd.f32 %v1252, %v1255
    %vm1257 = vweird.f32 %v1251
    %vm1258 = vweird.f32 %v1252
    %vm1259 = vmor %vm1257, %vm1258
    %v1260 = vsel %vm1259, %v1252, %v1256
    %v1261 = vand.u32 2147483647, %v1251
    %vm1262 = vcmp.eq.f32.partialorder %v1261, 8.507059e+37
    %v1263 = vand.u32 %v1251, 2147483648
    %v1264 = vor.u32 1.1754944e-38, %v1263
    %v1265 = vsel %vm1262, %v1264, %v1260
    %v1266 = vmul.f32 1.0, %v1265
    %v1267 = vmul.f32 %v1246, %v1140
    %v1268 = vmul.f32 %v1227, %v1247
    %v1269 = vadd.f32 %v1267, %v1268
    %v1270 = vtanh.pop %v1269
    %v1271 = vmul.f32 %v1266, %v1270
    %s1272 = scalar_lea.vmem [#allocation9], 56
    %1273 = vst [vmem:[%s1272] sm:$0xff] %v1271
    %1274 = vst [vmem:[#allocation2] sm:$0xff] %v1271
    %1275 = vst [vmem:[#allocation3] sm:$0xff] %v1269
    // Predicated region
    $region22: #{tpu_custom_call.1} parent=1 // pred_check
      _
    $region23: #{tpu_custom_call.1} parent=1 // pred_check_branch
      %1277 = sbr.rel (0) target = $region25
    $region24: #{tpu_custom_call.1} parent=1 // pred_region
      %1279 = vsyncadd [#allocation6], 0
      %s1280 = sshll.u32 [#allocation9], 4
      %s1281 = int_to_ptr.vmem [resolvable:$true] %s1280
      %s1282 = sshll.u32 %s2, 4
      %s1283 = int_to_ptr.hbm [resolvable:$true] %s1282
      %1288 = dma.vmem_to_hbm [thread:$0]  %s1281, 1024, %s1283, [#allocation6], 128, 128, 8
    $region25: #{tpu_custom_call.1} parent=1 // pred_fallthru
      _
    // Predicated region
    $region26: #{tpu_custom_call.1} parent=1 // pred_check
      _
    $region27: #{tpu_custom_call.1} parent=1 // pred_check_branch
      %1290 = sbr.rel (0) target = $region29
    $region28: #{tpu_custom_call.1} parent=1 // pred_region
      %1292 = dma.done [#allocation6], 1024
    $region29: #{tpu_custom_call.1} parent=1 // pred_fallthru
      _
    %1293 = vsyncpa [#allocation5], 1
    %1294 = vsyncpa [#allocation8], 1
    %1295 = vsyncpa [#allocation6], 1

</llo_original>
